<compile_context>
chip_gen: v7x
topology: tpu7x:2x2x1
jax: 0.10.0
libtpu: 0.0.40
codegen_flags: <defaults>
</compile_context>

<pallas_src>
import math
import jax
import jax.numpy as jnp
from jax.experimental import pallas as pl
from jax.experimental.pallas import tpu as pltpu


def residual_block_kernel(
    x_ref, cond_ref, diff_ref, spk_ref,
    xl_ref, xr_ref, cl_ref, cr_ref,
    wd_ref, wc_ref, bc_ref, ws_ref,
    w3_ref, b3_ref, wo_ref, bo_ref,
    out_ref,
):
    f32 = jnp.float32
    bf16 = jnp.bfloat16

    t_idx = pl.program_id(1)
    num_t = pl.num_programs(1)

    x = x_ref[0]            # (TT, C) f32
    cond = cond_ref[0]      # (TT, E) f32
    d = diff_ref[0]         # (1, C)
    s = spk_ref[0]          # (1, S)
    x_l = xl_ref[0, 0]      # (1, C)  global row just before this tile
    x_r = xr_ref[0, 0]      # (1, C)  global row just after this tile
    c_l = cl_ref[0, 0]      # (1, E)
    c_r = cr_ref[0, 0]      # (1, E)

    TT, C = x.shape
    wc = wc_ref[...]        # (E, C) bf16
    bc = bc_ref[...]        # (1, C) f32

    # Per-batch broadcast projections (tiny matmuls).
    diff_proj = jnp.dot(d.astype(bf16), wd_ref[...], preferred_element_type=f32)  # (1, C)
    spk_proj = jnp.dot(s.astype(bf16), ws_ref[...], preferred_element_type=f32)   # (1, C)
    bcast = diff_proj + spk_proj + bc   # constant-per-row part of y

    # y = x + diffusion_proj + speaker_proj + conditioner_proj(+bias)
    cond_proj = jnp.dot(cond.astype(bf16), wc, preferred_element_type=f32)         # (TT, C)
    y = x + bcast + cond_proj

    # Halo rows of y for the k=3 conv; zeroed at true sequence boundaries so
    # they play the role of the conv's zero padding.
    y_l = x_l + bcast + jnp.dot(c_l.astype(bf16), wc, preferred_element_type=f32)  # (1, C)
    y_r = x_r + bcast + jnp.dot(c_r.astype(bf16), wc, preferred_element_type=f32)  # (1, C)
    y_l = y_l * (t_idx > 0).astype(f32)
    y_r = y_r * (t_idx < num_t - 1).astype(f32)

    # Shifted copies via XLU roll + boundary-row patch (no sublane concatenate).
    row = jax.lax.broadcasted_iota(jnp.int32, (TT, C), 0)
    y_prev = jnp.where(row == 0, y_l, pltpu.roll(y, 1, axis=0))             # y[t-1]
    y_next = jnp.where(row == TT - 1, y_r, pltpu.roll(y, TT - 1, axis=0))   # y[t+1]

    # conv_layer: Conv1d(C -> 2C, k=3, pad=1); gate|filter output halves fused.
    # Tap 0 applies to y[t-1], tap 1 to y[t], tap 2 to y[t+1] (PyTorch k order).
    z = (jnp.dot(y_prev.astype(bf16), w3_ref[0], preferred_element_type=f32)
         + jnp.dot(y.astype(bf16), w3_ref[1], preferred_element_type=f32)
         + jnp.dot(y_next.astype(bf16), w3_ref[2], preferred_element_type=f32)
         + b3_ref[...])                                                      # (TT, 2C)

    y2 = jax.nn.sigmoid(z[:, :C]) * jnp.tanh(z[:, C:])                       # (TT, C) f32

    # output_projection: Conv1d(C -> 2C, k=1); x|skip output halves fused.
    o = jnp.dot(y2.astype(bf16), wo_ref[...], preferred_element_type=f32) + bo_ref[...]  # (TT, 2C)

    residual = x + diff_proj
    out_x = (o[:, :C] + residual) * (1.0 / math.sqrt(2.0))
    # Single lane-dense (TT, 2C) store; split into (x, skip) in the wrapper.
    out_ref[0] = jnp.concatenate([out_x, o[:, C:]], axis=-1)


def pack_params(p):
    """Fuse weights for the kernel. Input dict uses (in, out) layout:
       wd (C,C), wc (E,C), bc (1,C), ws (S,C),
       w3g/w3f (3,C,C) with tap 0 -> x[t-1], tap 1 -> x[t], tap 2 -> x[t+1],
       b3g/b3f (1,C), wox/wos (C,C), box/bos (1,C)."""
    bf16 = jnp.bfloat16
    f32 = jnp.float32
    return {
        "wd": p["wd"].astype(bf16),
        "wc": p["wc"].astype(bf16),
        "bc": p["bc"].astype(f32),
        "ws": p["ws"].astype(bf16),
        # gate|filter fused along output channels (== torch.chunk over dim=1).
        "w3": jnp.concatenate([p["w3g"], p["w3f"]], axis=-1).astype(bf16),  # (3, C, 2C)
        "b3": jnp.concatenate([p["b3g"], p["b3f"]], axis=-1).astype(f32),   # (1, 2C)
        # x|skip fused along output channels.
        "wo": jnp.concatenate([p["wox"], p["wos"]], axis=-1).astype(bf16),  # (C, 2C)
        "bo": jnp.concatenate([p["box"], p["bos"]], axis=-1).astype(f32),   # (1, 2C)
    }


def residual_block_pallas(x, cond, diff, spk, packed, *, tile_t=256):
    B, T, C = x.shape
    E = cond.shape[-1]
    S = spk.shape[-1]

    # Time tiling: tile_t must evenly divide T and be sublane-aligned;
    # otherwise fall back to a whole-sequence block. 256 rows keeps VMEM small
    # enough for v7x's 64 MiB while amortizing per-step overhead on v5e/v6e.
    if tile_t >= T or T % tile_t != 0 or tile_t % 8 != 0:
        tile_t = T
    num_t = T // tile_t

    # 1-row conv halo per tile, pre-gathered (tiny) so every in-kernel block
    # keeps a lane-dense / sublane-aligned shape.
    starts = jnp.arange(num_t) * tile_t
    rows_l = jnp.clip(starts - 1, 0, T - 1)
    rows_r = jnp.clip(starts + tile_t, 0, T - 1)
    x_lh = jnp.take(x, rows_l, axis=1)[:, :, None, :]     # (B, num_t, 1, C)
    x_rh = jnp.take(x, rows_r, axis=1)[:, :, None, :]
    c_lh = jnp.take(cond, rows_l, axis=1)[:, :, None, :]  # (B, num_t, 1, E)
    c_rh = jnp.take(cond, rows_r, axis=1)[:, :, None, :]

    wd, wc, bc, ws = packed["wd"], packed["wc"], packed["bc"], packed["ws"]
    w3, b3, wo, bo = packed["w3"], packed["b3"], packed["wo"], packed["bo"]

    def full(a):
        nd = a.ndim
        return pl.BlockSpec(a.shape, lambda b, t, _nd=nd: (0,) * _nd)

    in_specs = [
        pl.BlockSpec((1, tile_t, C), lambda b, t: (b, t, 0)),      # x tile
        pl.BlockSpec((1, tile_t, E), lambda b, t: (b, t, 0)),      # conditioner tile
        pl.BlockSpec((1, 1, C), lambda b, t: (b, 0, 0)),           # diffusion step
        pl.BlockSpec((1, 1, S), lambda b, t: (b, 0, 0)),           # speaker emb
        pl.BlockSpec((1, 1, 1, C), lambda b, t: (b, t, 0, 0)),     # x left halo row
        pl.BlockSpec((1, 1, 1, C), lambda b, t: (b, t, 0, 0)),     # x right halo row
        pl.BlockSpec((1, 1, 1, E), lambda b, t: (b, t, 0, 0)),     # cond left halo row
        pl.BlockSpec((1, 1, 1, E), lambda b, t: (b, t, 0, 0)),     # cond right halo row
        full(wd), full(wc), full(bc), full(ws),
        full(w3), full(b3), full(wo), full(bo),
    ]
    out_specs = pl.BlockSpec((1, tile_t, 2 * C), lambda b, t: (b, t, 0))
    out_shape = jax.ShapeDtypeStruct((B, T, 2 * C), jnp.float32)

    out = pl.pallas_call(
        residual_block_kernel,
        out_shape=out_shape,
        grid_spec=pltpu.PrefetchScalarGridSpec(
            num_scalar_prefetch=0,
            grid=(B, num_t),
            in_specs=in_specs,
            out_specs=out_specs,
        ),
        compiler_params=pltpu.CompilerParams(
            dimension_semantics=("parallel", "parallel")),
    )(x, cond, diff, spk, x_lh, x_rh, c_lh, c_rh,
      wd, wc, bc, ws, w3, b3, wo, bo)

    # Split the fused lane-dense slab outside the kernel.
    return out[..., :C], out[..., C:]


def residual_block_ref(x, cond, diff, spk, p):
    """Pure-JAX f32 reference with the original (unfused) parameters."""
    diff_proj = diff @ p["wd"]                        # (B, 1, C)
    cond_proj = cond @ p["wc"] + p["bc"]              # (B, T, C)
    spk_proj = spk @ p["ws"]                          # (B, 1, C)
    residual = x + diff_proj
    y = residual + cond_proj + spk_proj
    zeros_row = jnp.zeros_like(y[:, :1, :])
    y_prev = jnp.concatenate([zeros_row, y[:, :-1, :]], axis=1)
    y_next = jnp.concatenate([y[:, 1:, :], zeros_row], axis=1)
    zg = y_prev @ p["w3g"][0] + y @ p["w3g"][1] + y_next @ p["w3g"][2] + p["b3g"]
    zf = y_prev @ p["w3f"][0] + y @ p["w3f"][1] + y_next @ p["w3f"][2] + p["b3f"]
    y2 = jax.nn.sigmoid(zg) * jnp.tanh(zf)
    x_out = y2 @ p["wox"] + p["box"]
    skip = y2 @ p["wos"] + p["bos"]
    return (x_out + residual) / math.sqrt(2.0), skip


if __name__ == "__main__":
    B, T = 2, 16
    C = 64   # residual_channels
    E = 32   # d_encoder
    S = 32   # d_spk_prj

    key = jax.random.PRNGKey(0)
    keys = jax.random.split(key, 18)

    def nrm(k, shape, std):
        return (jax.random.normal(k, shape, jnp.float32) * std).astype(jnp.float32)

    raw = {
        # diffusion_projection: Linear(C -> C), xavier
        "wd": nrm(keys[0], (C, C), math.sqrt(2.0 / (C + C))),
        # conditioner_projection: Conv1d(E -> C, k=1), kaiming
        "wc": nrm(keys[1], (E, C), math.sqrt(2.0 / E)),
        "bc": nrm(keys[2], (1, C), 0.05),
        # speaker_projection: Linear(S -> C), xavier
        "ws": nrm(keys[3], (S, C), math.sqrt(2.0 / (S + C))),
        # conv_layer: Conv1d(C -> 2C, k=3); tap 0 -> x[t-1], tap 1 -> x[t], tap 2 -> x[t+1]
        "w3g": nrm(keys[4], (3, C, C), math.sqrt(2.0 / (3 * C))),
        "w3f": nrm(keys[5], (3, C, C), math.sqrt(2.0 / (3 * C))),
        "b3g": nrm(keys[6], (1, C), 0.05),
        "b3f": nrm(keys[7], (1, C), 0.05),
        # output_projection: Conv1d(C -> 2C, k=1), split into x/skip halves
        "wox": nrm(keys[8], (C, C), math.sqrt(2.0 / C)),
        "wos": nrm(keys[9], (C, C), math.sqrt(2.0 / C)),
        "box": nrm(keys[10], (1, C), 0.05),
        "bos": nrm(keys[11], (1, C), 0.05),
    }
    packed = pack_params(raw)

    x = jax.random.normal(keys[12], (B, T, C), jnp.float32)
    cond = jax.random.normal(keys[13], (B, T, E), jnp.float32)
    diff = jax.random.normal(keys[14], (B, 1, C), jnp.float32)
    spk = jax.random.normal(keys[15], (B, 1, S), jnp.float32)

    out_x, out_skip = residual_block_pallas(x, cond, diff, spk, packed)
    jax.block_until_ready(out_x)
    jax.block_until_ready(out_skip)

    ref_x, ref_skip = residual_block_ref(x, cond, diff, spk, raw)
    # bf16 MXU inputs with f32 accumulation -> relaxed tolerance vs. f32 ref.
    assert jnp.allclose(out_x, ref_x, atol=5e-2, rtol=5e-2), "x mismatch"
    assert jnp.allclose(out_skip, ref_skip, atol=5e-2, rtol=5e-2), "skip mismatch"

    # Also exercise the multi-tile (time-tiled + halo) path.
    T2 = 256
    x2 = jax.random.normal(keys[16], (B, T2, C), jnp.float32)
    cond2 = jax.random.normal(keys[17], (B, T2, E), jnp.float32)
    out_x2, out_skip2 = residual_block_pallas(x2, cond2, diff, spk, packed, tile_t=128)
    jax.block_until_ready(out_x2)
    ref_x2, ref_skip2 = residual_block_ref(x2, cond2, diff, spk, raw)
    assert jnp.allclose(out_x2, ref_x2, atol=5e-2, rtol=5e-2), "tiled x mismatch"
    assert jnp.allclose(out_skip2, ref_skip2, atol=5e-2, rtol=5e-2), "tiled skip mismatch"

    print("KERNEL_OK")
</pallas_src>

<mosaic_0001>
module attributes {stable_mosaic.version = 11 : i64} {
  func.func @residual_block_kernel(%arg0: i32, %arg1: i32, %arg2: memref<1x16x64xf32, #tpu.memory_space<vmem>>, %arg3: memref<1x16x32xf32, #tpu.memory_space<vmem>>, %arg4: memref<1x1x64xf32, #tpu.memory_space<vmem>>, %arg5: memref<1x1x32xf32, #tpu.memory_space<vmem>>, %arg6: memref<1x1x1x64xf32, #tpu.memory_space<vmem>>, %arg7: memref<1x1x1x64xf32, #tpu.memory_space<vmem>>, %arg8: memref<1x1x1x32xf32, #tpu.memory_space<vmem>>, %arg9: memref<1x1x1x32xf32, #tpu.memory_space<vmem>>, %arg10: memref<64x64xbf16, #tpu.memory_space<vmem>>, %arg11: memref<32x64xbf16, #tpu.memory_space<vmem>>, %arg12: memref<1x64xf32, #tpu.memory_space<vmem>>, %arg13: memref<32x64xbf16, #tpu.memory_space<vmem>>, %arg14: memref<3x64x128xbf16, #tpu.memory_space<vmem>>, %arg15: memref<1x128xf32, #tpu.memory_space<vmem>>, %arg16: memref<64x128xbf16, #tpu.memory_space<vmem>>, %arg17: memref<1x128xf32, #tpu.memory_space<vmem>>, %arg18: memref<1x16x128xf32, #tpu.memory_space<vmem>>) attributes {dimension_semantics = [#tpu.dimension_semantics<parallel>, #tpu.dimension_semantics<parallel>], iteration_bounds = array<i64: 2, 1>, scalar_prefetch = 0 : i64, scratch_operands = 0 : i64, tpu.core_type = #tpu.core_type<tc>, window_params = [{transform_indices = @transform_0, window_bounds = array<i64: 1, 16, 64>}, {transform_indices = @transform_1, window_bounds = array<i64: 1, 16, 32>}, {transform_indices = @transform_2, window_bounds = array<i64: 1, 1, 64>}, {transform_indices = @transform_3, window_bounds = array<i64: 1, 1, 32>}, {transform_indices = @transform_4, window_bounds = array<i64: 1, 1, 1, 64>}, {transform_indices = @transform_5, window_bounds = array<i64: 1, 1, 1, 64>}, {transform_indices = @transform_6, window_bounds = array<i64: 1, 1, 1, 32>}, {transform_indices = @transform_7, window_bounds = array<i64: 1, 1, 1, 32>}, {pipeline_mode = #tpu.pipeline_mode<synchronous>, transform_indices = @transform_8, window_bounds = array<i64: 64, 64>}, {pipeline_mode = #tpu.pipeline_mode<synchronous>, transform_indices = @transform_9, window_bounds = array<i64: 32, 64>}, {pipeline_mode = #tpu.pipeline_mode<synchronous>, transform_indices = @transform_10, window_bounds = array<i64: 1, 64>}, {pipeline_mode = #tpu.pipeline_mode<synchronous>, transform_indices = @transform_11, window_bounds = array<i64: 32, 64>}, {pipeline_mode = #tpu.pipeline_mode<synchronous>, transform_indices = @transform_12, window_bounds = array<i64: 3, 64, 128>}, {pipeline_mode = #tpu.pipeline_mode<synchronous>, transform_indices = @transform_13, window_bounds = array<i64: 1, 128>}, {pipeline_mode = #tpu.pipeline_mode<synchronous>, transform_indices = @transform_14, window_bounds = array<i64: 64, 128>}, {pipeline_mode = #tpu.pipeline_mode<synchronous>, transform_indices = @transform_15, window_bounds = array<i64: 1, 128>}, {transform_indices = @transform_16, window_bounds = array<i64: 1, 16, 128>}]} {
    %c0 = arith.constant 0 : index
    %c0_0 = arith.constant 0 : index
    %c0_1 = arith.constant 0 : index
    %0 = vector.load %arg2[%c0, %c0_0, %c0_1] : memref<1x16x64xf32, #tpu.memory_space<vmem>>, vector<1x16x64xf32>
    %1 = vector.shape_cast %0 : vector<1x16x64xf32> to vector<16x64xf32>
    %c0_2 = arith.constant 0 : index
    %c0_3 = arith.constant 0 : index
    %c0_4 = arith.constant 0 : index
    %2 = vector.load %arg3[%c0_2, %c0_3, %c0_4] : memref<1x16x32xf32, #tpu.memory_space<vmem>>, vector<1x16x32xf32>
    %3 = vector.shape_cast %2 : vector<1x16x32xf32> to vector<16x32xf32>
    %c0_5 = arith.constant 0 : index
    %c0_6 = arith.constant 0 : index
    %c0_7 = arith.constant 0 : index
    %4 = vector.load %arg4[%c0_5, %c0_6, %c0_7] : memref<1x1x64xf32, #tpu.memory_space<vmem>>, vector<1x1x64xf32>
    %5 = vector.shape_cast %4 : vector<1x1x64xf32> to vector<1x64xf32>
    %c0_8 = arith.constant 0 : index
    %c0_9 = arith.constant 0 : index
    %c0_10 = arith.constant 0 : index
    %6 = vector.load %arg5[%c0_8, %c0_9, %c0_10] : memref<1x1x32xf32, #tpu.memory_space<vmem>>, vector<1x1x32xf32>
    %7 = vector.shape_cast %6 : vector<1x1x32xf32> to vector<1x32xf32>
    %c0_11 = arith.constant 0 : index
    %c0_12 = arith.constant 0 : index
    %c0_13 = arith.constant 0 : index
    %c0_14 = arith.constant 0 : index
    %8 = vector.load %arg6[%c0_11, %c0_12, %c0_13, %c0_14] : memref<1x1x1x64xf32, #tpu.memory_space<vmem>>, vector<1x1x1x64xf32>
    %9 = vector.shape_cast %8 : vector<1x1x1x64xf32> to vector<1x64xf32>
    %c0_15 = arith.constant 0 : index
    %c0_16 = arith.constant 0 : index
    %c0_17 = arith.constant 0 : index
    %c0_18 = arith.constant 0 : index
    %10 = vector.load %arg7[%c0_15, %c0_16, %c0_17, %c0_18] : memref<1x1x1x64xf32, #tpu.memory_space<vmem>>, vector<1x1x1x64xf32>
    %11 = vector.shape_cast %10 : vector<1x1x1x64xf32> to vector<1x64xf32>
    %c0_19 = arith.constant 0 : index
    %c0_20 = arith.constant 0 : index
    %c0_21 = arith.constant 0 : index
    %c0_22 = arith.constant 0 : index
    %12 = vector.load %arg8[%c0_19, %c0_20, %c0_21, %c0_22] : memref<1x1x1x32xf32, #tpu.memory_space<vmem>>, vector<1x1x1x32xf32>
    %13 = vector.shape_cast %12 : vector<1x1x1x32xf32> to vector<1x32xf32>
    %c0_23 = arith.constant 0 : index
    %c0_24 = arith.constant 0 : index
    %c0_25 = arith.constant 0 : index
    %c0_26 = arith.constant 0 : index
    %14 = vector.load %arg9[%c0_23, %c0_24, %c0_25, %c0_26] : memref<1x1x1x32xf32, #tpu.memory_space<vmem>>, vector<1x1x1x32xf32>
    %15 = vector.shape_cast %14 : vector<1x1x1x32xf32> to vector<1x32xf32>
    %c0_27 = arith.constant 0 : index
    %c0_28 = arith.constant 0 : index
    %16 = vector.load %arg11[%c0_27, %c0_28] : memref<32x64xbf16, #tpu.memory_space<vmem>>, vector<32x64xbf16>
    %c0_29 = arith.constant 0 : index
    %c0_30 = arith.constant 0 : index
    %17 = vector.load %arg12[%c0_29, %c0_30] : memref<1x64xf32, #tpu.memory_space<vmem>>, vector<1x64xf32>
    %18 = arith.truncf %5 : vector<1x64xf32> to vector<1x64xbf16>
    %c0_31 = arith.constant 0 : index
    %c0_32 = arith.constant 0 : index
    %19 = vector.load %arg10[%c0_31, %c0_32] : memref<64x64xbf16, #tpu.memory_space<vmem>>, vector<64x64xbf16>
    %cst = arith.constant dense<0.000000e+00> : vector<1x64xf32>
    %20 = tpu.matmul %18, %19, %cst {dimension_numbers = #tpu.dot_dimension_numbers<[1], [0], [0], [1], [0, 0, 1, 1], [], []>} : vector<1x64xbf16>, vector<64x64xbf16>, vector<1x64xf32> -> vector<1x64xf32>
    %21 = arith.truncf %7 : vector<1x32xf32> to vector<1x32xbf16>
    %c0_33 = arith.constant 0 : index
    %c0_34 = arith.constant 0 : index
    %22 = vector.load %arg13[%c0_33, %c0_34] : memref<32x64xbf16, #tpu.memory_space<vmem>>, vector<32x64xbf16>
    %cst_35 = arith.constant dense<0.000000e+00> : vector<1x64xf32>
    %23 = tpu.matmul %21, %22, %cst_35 {dimension_numbers = #tpu.dot_dimension_numbers<[1], [0], [0], [1], [0, 0, 1, 1], [], []>} : vector<1x32xbf16>, vector<32x64xbf16>, vector<1x64xf32> -> vector<1x64xf32>
    %24 = arith.addf %20, %23 : vector<1x64xf32>
    %25 = arith.addf %24, %17 : vector<1x64xf32>
    %26 = arith.truncf %3 : vector<16x32xf32> to vector<16x32xbf16>
    %cst_36 = arith.constant dense<0.000000e+00> : vector<16x64xf32>
    %27 = tpu.matmul %26, %16, %cst_36 {dimension_numbers = #tpu.dot_dimension_numbers<[1], [0], [0], [1], [0, 0, 1, 1], [], []>} : vector<16x32xbf16>, vector<32x64xbf16>, vector<16x64xf32> -> vector<16x64xf32>
    %28 = vector.broadcast %25 : vector<1x64xf32> to vector<16x64xf32>
    %29 = arith.addf %1, %28 : vector<16x64xf32>
    %30 = arith.addf %29, %27 : vector<16x64xf32>
    %31 = arith.addf %9, %25 : vector<1x64xf32>
    %32 = arith.truncf %13 : vector<1x32xf32> to vector<1x32xbf16>
    %cst_37 = arith.constant dense<0.000000e+00> : vector<1x64xf32>
    %33 = tpu.matmul %32, %16, %cst_37 {dimension_numbers = #tpu.dot_dimension_numbers<[1], [0], [0], [1], [0, 0, 1, 1], [], []>} : vector<1x32xbf16>, vector<32x64xbf16>, vector<1x64xf32> -> vector<1x64xf32>
    %34 = arith.addf %31, %33 : vector<1x64xf32>
    %35 = arith.addf %11, %25 : vector<1x64xf32>
    %36 = arith.truncf %15 : vector<1x32xf32> to vector<1x32xbf16>
    %cst_38 = arith.constant dense<0.000000e+00> : vector<1x64xf32>
    %37 = tpu.matmul %36, %16, %cst_38 {dimension_numbers = #tpu.dot_dimension_numbers<[1], [0], [0], [1], [0, 0, 1, 1], [], []>} : vector<1x32xbf16>, vector<32x64xbf16>, vector<1x64xf32> -> vector<1x64xf32>
    %38 = arith.addf %35, %37 : vector<1x64xf32>
    %c0_i32 = arith.constant 0 : i32
    %39 = arith.cmpi sgt, %arg1, %c0_i32 : i32
    %40 = arith.extui %39 : i1 to i32
    %41 = arith.sitofp %40 : i32 to f32
    %42 = vector.broadcast %41 : f32 to vector<1x64xf32>
    %43 = arith.mulf %34, %42 : vector<1x64xf32>
    %c0_i32_39 = arith.constant 0 : i32
    %44 = arith.cmpi slt, %arg1, %c0_i32_39 : i32
    %45 = arith.extui %44 : i1 to i32
    %46 = arith.sitofp %45 : i32 to f32
    %47 = vector.broadcast %46 : f32 to vector<1x64xf32>
    %48 = arith.mulf %38, %47 : vector<1x64xf32>
    %49 = tpu.iota {dimensions = array<i32: 0>} : vector<16x64xi32>
    %c0_i32_40 = arith.constant 0 : i32
    %50 = vector.broadcast %c0_i32_40 : i32 to vector<16x64xi32>
    %51 = arith.cmpi eq, %49, %50 : vector<16x64xi32>
    %c1_i32 = arith.constant 1 : i32
    %52 = tpu.dynamic_rotate %30 by %c1_i32 dim 0 : vector<16x64xf32>, i32 -> vector<16x64xf32>
    %53 = vector.shape_cast %43 : vector<1x64xf32> to vector<1x64xf32>
    %54 = vector.broadcast %53 : vector<1x64xf32> to vector<16x64xf32>
    %55 = arith.select %51, %54, %52 : vector<16x64xi1>, vector<16x64xf32>
    %c15_i32 = arith.constant 15 : i32
    %56 = vector.broadcast %c15_i32 : i32 to vector<16x64xi32>
    %57 = arith.cmpi eq, %49, %56 : vector<16x64xi32>
    %c15_i32_41 = arith.constant 15 : i32
    %58 = tpu.dynamic_rotate %30 by %c15_i32_41 dim 0 : vector<16x64xf32>, i32 -> vector<16x64xf32>
    %59 = vector.shape_cast %48 : vector<1x64xf32> to vector<1x64xf32>
    %60 = vector.broadcast %59 : vector<1x64xf32> to vector<16x64xf32>
    %61 = arith.select %57, %60, %58 : vector<16x64xi1>, vector<16x64xf32>
    %62 = arith.truncf %55 : vector<16x64xf32> to vector<16x64xbf16>
    %c0_42 = arith.constant 0 : index
    %c0_43 = arith.constant 0 : index
    %c0_44 = arith.constant 0 : index
    %63 = vector.load %arg14[%c0_42, %c0_43, %c0_44] : memref<3x64x128xbf16, #tpu.memory_space<vmem>>, vector<1x64x128xbf16>
    %64 = vector.shape_cast %63 : vector<1x64x128xbf16> to vector<64x128xbf16>
    %cst_45 = arith.constant dense<0.000000e+00> : vector<16x128xf32>
    %65 = tpu.matmul %62, %64, %cst_45 {dimension_numbers = #tpu.dot_dimension_numbers<[1], [0], [0], [1], [0, 0, 1, 1], [], []>} : vector<16x64xbf16>, vector<64x128xbf16>, vector<16x128xf32> -> vector<16x128xf32>
    %66 = arith.truncf %30 : vector<16x64xf32> to vector<16x64xbf16>
    %c1 = arith.constant 1 : index
    %c0_46 = arith.constant 0 : index
    %c0_47 = arith.constant 0 : index
    %67 = vector.load %arg14[%c1, %c0_46, %c0_47] : memref<3x64x128xbf16, #tpu.memory_space<vmem>>, vector<1x64x128xbf16>
    %68 = vector.shape_cast %67 : vector<1x64x128xbf16> to vector<64x128xbf16>
    %cst_48 = arith.constant dense<0.000000e+00> : vector<16x128xf32>
    %69 = tpu.matmul %66, %68, %cst_48 {dimension_numbers = #tpu.dot_dimension_numbers<[1], [0], [0], [1], [0, 0, 1, 1], [], []>} : vector<16x64xbf16>, vector<64x128xbf16>, vector<16x128xf32> -> vector<16x128xf32>
    %70 = arith.addf %65, %69 : vector<16x128xf32>
    %71 = arith.truncf %61 : vector<16x64xf32> to vector<16x64xbf16>
    %c2 = arith.constant 2 : index
    %c0_49 = arith.constant 0 : index
    %c0_50 = arith.constant 0 : index
    %72 = vector.load %arg14[%c2, %c0_49, %c0_50] : memref<3x64x128xbf16, #tpu.memory_space<vmem>>, vector<1x64x128xbf16>
    %73 = vector.shape_cast %72 : vector<1x64x128xbf16> to vector<64x128xbf16>
    %cst_51 = arith.constant dense<0.000000e+00> : vector<16x128xf32>
    %74 = tpu.matmul %71, %73, %cst_51 {dimension_numbers = #tpu.dot_dimension_numbers<[1], [0], [0], [1], [0, 0, 1, 1], [], []>} : vector<16x64xbf16>, vector<64x128xbf16>, vector<16x128xf32> -> vector<16x128xf32>
    %75 = arith.addf %70, %74 : vector<16x128xf32>
    %c0_52 = arith.constant 0 : index
    %c0_53 = arith.constant 0 : index
    %76 = vector.load %arg15[%c0_52, %c0_53] : memref<1x128xf32, #tpu.memory_space<vmem>>, vector<1x128xf32>
    %77 = vector.broadcast %76 : vector<1x128xf32> to vector<16x128xf32>
    %78 = arith.addf %75, %77 : vector<16x128xf32>
    %79 = vector.extract_strided_slice %78 {offsets = [0, 0], sizes = [16, 64], strides = [1, 1]} : vector<16x128xf32> to vector<16x64xf32>
    %80 = arith.negf %79 : vector<16x64xf32>
    %81 = math.exp %80 : vector<16x64xf32>
    %cst_54 = arith.constant 1.000000e+00 : f32
    %82 = vector.broadcast %cst_54 : f32 to vector<16x64xf32>
    %83 = arith.addf %82, %81 : vector<16x64xf32>
    %84 = arith.divf %82, %83 : vector<16x64xf32>
    %85 = vector.extract_strided_slice %78 {offsets = [0, 64], sizes = [16, 64], strides = [1, 1]} : vector<16x128xf32> to vector<16x64xf32>
    %86 = math.tanh %85 : vector<16x64xf32>
    %87 = arith.mulf %84, %86 : vector<16x64xf32>
    %88 = arith.truncf %87 : vector<16x64xf32> to vector<16x64xbf16>
    %c0_55 = arith.constant 0 : index
    %c0_56 = arith.constant 0 : index
    %89 = vector.load %arg16[%c0_55, %c0_56] : memref<64x128xbf16, #tpu.memory_space<vmem>>, vector<64x128xbf16>
    %cst_57 = arith.constant dense<0.000000e+00> : vector<16x128xf32>
    %90 = tpu.matmul %88, %89, %cst_57 {dimension_numbers = #tpu.dot_dimension_numbers<[1], [0], [0], [1], [0, 0, 1, 1], [], []>} : vector<16x64xbf16>, vector<64x128xbf16>, vector<16x128xf32> -> vector<16x128xf32>
    %c0_58 = arith.constant 0 : index
    %c0_59 = arith.constant 0 : index
    %91 = vector.load %arg17[%c0_58, %c0_59] : memref<1x128xf32, #tpu.memory_space<vmem>>, vector<1x128xf32>
    %92 = vector.broadcast %91 : vector<1x128xf32> to vector<16x128xf32>
    %93 = arith.addf %90, %92 : vector<16x128xf32>
    %94 = vector.broadcast %20 : vector<1x64xf32> to vector<16x64xf32>
    %95 = arith.addf %1, %94 : vector<16x64xf32>
    %96 = vector.extract_strided_slice %93 {offsets = [0, 0], sizes = [16, 64], strides = [1, 1]} : vector<16x128xf32> to vector<16x64xf32>
    %97 = arith.addf %96, %95 : vector<16x64xf32>
    %cst_60 = arith.constant 0.707106769 : f32
    %98 = vector.broadcast %cst_60 : f32 to vector<16x64xf32>
    %99 = arith.mulf %97, %98 : vector<16x64xf32>
    %100 = vector.extract_strided_slice %93 {offsets = [0, 64], sizes = [16, 64], strides = [1, 1]} : vector<16x128xf32> to vector<16x64xf32>
    %101 = tpu.concatenate %99, %100 in 1 : vector<16x64xf32>, vector<16x64xf32> -> vector<16x128xf32>
    %c0_61 = arith.constant 0 : index
    %c0_62 = arith.constant 0 : index
    %c0_63 = arith.constant 0 : index
    %102 = vector.load %arg18[%c0_61, %c0_62, %c0_63] : memref<1x16x128xf32, #tpu.memory_space<vmem>>, vector<1x16x128xf32>
    %103 = vector.shape_cast %102 : vector<1x16x128xf32> to vector<16x128xf32>
    %104 = vector.shape_cast %101 : vector<16x128xf32> to vector<1x16x128xf32>
    tpu.vector_store %arg18[%c0_61, %c0_62, %c0_63], %104 {strides = array<i32>} : memref<1x16x128xf32, #tpu.memory_space<vmem>>, vector<1x16x128xf32>,
    return
  }
  func.func @transform_0(%arg0: i32, %arg1: i32) -> (i32, i32, i32) {
    %c0_i32 = arith.constant 0 : i32
    %c0_i32_0 = arith.constant 0 : i32
    return %arg0, %arg1, %c0_i32 : i32, i32, i32
  }
  func.func @transform_1(%arg0: i32, %arg1: i32) -> (i32, i32, i32) {
    %c0_i32 = arith.constant 0 : i32
    %c0_i32_0 = arith.constant 0 : i32
    return %arg0, %arg1, %c0_i32 : i32, i32, i32
  }
  func.func @transform_2(%arg0: i32, %arg1: i32) -> (i32, i32, i32) {
    %c0_i32 = arith.constant 0 : i32
    %c0_i32_0 = arith.constant 0 : i32
    %c0_i32_1 = arith.constant 0 : i32
    return %arg0, %c0_i32, %c0_i32_0 : i32, i32, i32
  }
  func.func @transform_3(%arg0: i32, %arg1: i32) -> (i32, i32, i32) {
    %c0_i32 = arith.constant 0 : i32
    %c0_i32_0 = arith.constant 0 : i32
    %c0_i32_1 = arith.constant 0 : i32
    return %arg0, %c0_i32, %c0_i32_0 : i32, i32, i32
  }
  func.func @transform_4(%arg0: i32, %arg1: i32) -> (i32, i32, i32, i32) {
    %c0_i32 = arith.constant 0 : i32
    %c0_i32_0 = arith.constant 0 : i32
    %c0_i32_1 = arith.constant 0 : i32
    return %arg0, %arg1, %c0_i32, %c0_i32_0 : i32, i32, i32, i32
  }
  func.func @transform_5(%arg0: i32, %arg1: i32) -> (i32, i32, i32, i32) {
    %c0_i32 = arith.constant 0 : i32
    %c0_i32_0 = arith.constant 0 : i32
    %c0_i32_1 = arith.constant 0 : i32
    return %arg0, %arg1, %c0_i32, %c0_i32_0 : i32, i32, i32, i32
  }
  func.func @transform_6(%arg0: i32, %arg1: i32) -> (i32, i32, i32, i32) {
    %c0_i32 = arith.constant 0 : i32
    %c0_i32_0 = arith.constant 0 : i32
    %c0_i32_1 = arith.constant 0 : i32
    return %arg0, %arg1, %c0_i32, %c0_i32_0 : i32, i32, i32, i32
  }
  func.func @transform_7(%arg0: i32, %arg1: i32) -> (i32, i32, i32, i32) {
    %c0_i32 = arith.constant 0 : i32
    %c0_i32_0 = arith.constant 0 : i32
    %c0_i32_1 = arith.constant 0 : i32
    return %arg0, %arg1, %c0_i32, %c0_i32_0 : i32, i32, i32, i32
  }
  func.func @transform_8(%arg0: i32, %arg1: i32) -> (i32, i32) {
    %c0_i32 = arith.constant 0 : i32
    %c0_i32_0 = arith.constant 0 : i32
    %c0_i32_1 = arith.constant 0 : i32
    return %c0_i32, %c0_i32_0 : i32, i32
  }
  func.func @transform_9(%arg0: i32, %arg1: i32) -> (i32, i32) {
    %c0_i32 = arith.constant 0 : i32
    %c0_i32_0 = arith.constant 0 : i32
    %c0_i32_1 = arith.constant 0 : i32
    return %c0_i32, %c0_i32_0 : i32, i32
  }
  func.func @transform_10(%arg0: i32, %arg1: i32) -> (i32, i32) {
    %c0_i32 = arith.constant 0 : i32
    %c0_i32_0 = arith.constant 0 : i32
    %c0_i32_1 = arith.constant 0 : i32
    return %c0_i32, %c0_i32_0 : i32, i32
  }
  func.func @transform_11(%arg0: i32, %arg1: i32) -> (i32, i32) {
    %c0_i32 = arith.constant 0 : i32
    %c0_i32_0 = arith.constant 0 : i32
    %c0_i32_1 = arith.constant 0 : i32
    return %c0_i32, %c0_i32_0 : i32, i32
  }
  func.func @transform_12(%arg0: i32, %arg1: i32) -> (i32, i32, i32) {
    %c0_i32 = arith.constant 0 : i32
    %c0_i32_0 = arith.constant 0 : i32
    %c0_i32_1 = arith.constant 0 : i32
    %c0_i32_2 = arith.constant 0 : i32
    return %c0_i32, %c0_i32_0, %c0_i32_1 : i32, i32, i32
  }
  func.func @transform_13(%arg0: i32, %arg1: i32) -> (i32, i32) {
    %c0_i32 = arith.constant 0 : i32
    %c0_i32_0 = arith.constant 0 : i32
    %c0_i32_1 = arith.constant 0 : i32
    return %c0_i32, %c0_i32_0 : i32, i32
  }
  func.func @transform_14(%arg0: i32, %arg1: i32) -> (i32, i32) {
    %c0_i32 = arith.constant 0 : i32
    %c0_i32_0 = arith.constant 0 : i32
    %c0_i32_1 = arith.constant 0 : i32
    return %c0_i32, %c0_i32_0 : i32, i32
  }
  func.func @transform_15(%arg0: i32, %arg1: i32) -> (i32, i32) {
    %c0_i32 = arith.constant 0 : i32
    %c0_i32_0 = arith.constant 0 : i32
    %c0_i32_1 = arith.constant 0 : i32
    return %c0_i32, %c0_i32_0 : i32, i32
  }
  func.func @transform_16(%arg0: i32, %arg1: i32) -> (i32, i32, i32) {
    %c0_i32 = arith.constant 0 : i32
    %c0_i32_0 = arith.constant 0 : i32
    return %arg0, %arg1, %c0_i32 : i32, i32, i32
  }
}

</mosaic_0001>

<llo_original>
// kernel: tpu_custom_call.1
$region0: #{tpu_custom_call.1}
  #allocation0 [shape = 'u32[]', space=smem, size = 0x4, offset = 0x4, fixed_abs, tag = 'smem constant byte address 0x4 - core index']
  #allocation1 [shape = 'u32[144,128]{1,0:T(1,128)}', space=vmem, size = 0x12000, scoped, tag = 'internal scratch']
  %s0 = inlined_call_operand.hbm [shape: f32[2,16,64], index: 0, kind: input, shape index: {}]
  %s1 = inlined_call_operand.hbm [shape: f32[2,16,32], index: 1, kind: input, shape index: {}]
  %s2 = inlined_call_operand.vmem [shape: f32[2,1,64], index: 2, kind: input, shape index: {}]
  %s3 = inlined_call_operand.vmem [shape: f32[2,1,32], index: 3, kind: input, shape index: {}]
  %s4 = inlined_call_operand.hbm [shape: f32[2,1,1,64], index: 4, kind: input, shape index: {}]
  %s5 = inlined_call_operand.hbm [shape: f32[2,1,1,64], index: 5, kind: input, shape index: {}]
  %s6 = inlined_call_operand.hbm [shape: f32[2,1,1,32], index: 6, kind: input, shape index: {}]
  %s7 = inlined_call_operand.hbm [shape: f32[2,1,1,32], index: 7, kind: input, shape index: {}]
  %s8 = inlined_call_operand.hbm [shape: bf16[64,64], index: 8, kind: input, shape index: {}]
  %s9 = inlined_call_operand.vmem [shape: bf16[32,64], index: 9, kind: input, shape index: {}]
  %s10 = inlined_call_operand.vmem [shape: f32[1,64], index: 10, kind: input, shape index: {}]
  %s11 = inlined_call_operand.hbm [shape: bf16[32,64], index: 11, kind: input, shape index: {}]
  %s12 = inlined_call_operand.hbm [shape: bf16[3,64,128], index: 12, kind: input, shape index: {}]
  %s13 = inlined_call_operand.hbm [shape: f32[1,128], index: 13, kind: input, shape index: {}]
  %s14 = inlined_call_operand.vmem [shape: bf16[64,128], index: 14, kind: input, shape index: {}]
  %s15 = inlined_call_operand.vmem [shape: f32[1,128], index: 15, kind: input, shape index: {}]
  %s16 = inlined_call_operand.hbm [shape: f32[2,16,128], index: 16, kind: output, shape index: {}]
  %s17 = sld [smem:[#allocation0]]
  $region137: #{tpu_custom_call.1} parent=0
    _
  %s19 = ssub.s32 1, %s17
  %s20 = scalar_select 0, %s19, %s17
  $region1: #{tpu_custom_call.1} parent=0
    #allocation2 [shape = 'u8[16384]{0}', space=vmem, size = 0x4000, scoped, tag = 'input window, operand 0']
    #allocation3 [shape = 's32[2]{0}', space=sflag, size = 0x8, scoped, tag = 'scoped memory for tpu_custom_call.1']
    #allocation4 [shape = 's32[2]{0}', space=sflag, size = 0x8, scoped, tag = 'scoped memory for tpu_custom_call.1']
    #allocation5 [shape = 'u8[16384]{0}', space=vmem, size = 0x4000, scoped, tag = 'input window, operand 1']
    #allocation6 [shape = 's32[2]{0}', space=sflag, size = 0x8, scoped, tag = 'scoped memory for tpu_custom_call.1']
    #allocation7 [shape = 'u8[1024]{0}', space=vmem, size = 0x400, scoped, tag = 'input window, operand 4']
    #allocation8 [shape = 'u8[1024]{0}', space=vmem, size = 0x400, scoped, tag = 'input window, operand 5']
    #allocation9 [shape = 's32[2]{0}', space=sflag, size = 0x8, scoped, tag = 'scoped memory for tpu_custom_call.1']
    #allocation10 [shape = 'u8[1024]{0}', space=vmem, size = 0x400, scoped, tag = 'input window, operand 6']
    #allocation11 [shape = 'u8[1024]{0}', space=vmem, size = 0x400, scoped, tag = 'input window, operand 7']
    #allocation12 [shape = 's32[2]{0}', space=sflag, size = 0x8, scoped, tag = 'scoped memory for tpu_custom_call.1']
    #allocation13 [shape = 'u8[16384]{0}', space=vmem, size = 0x4000, scoped, tag = 'input window, operand 8, single buffered']
    #allocation14 [shape = 'u8[8192]{0}', space=vmem, size = 0x2000, scoped, tag = 'input window, operand 11, single buffered']
    #allocation15 [shape = 's32[1]{0}', space=sflag, size = 0x4, scoped, tag = 'scoped memory for tpu_custom_call.1']
    #allocation16 [shape = 'u8[49152]{0}', space=vmem, size = 0xc000, scoped, tag = 'input window, operand 12, single buffered']
    #allocation17 [shape = 'u8[512]{0}', space=vmem, size = 0x400, scoped, tag = 'input window, operand 13, single buffered']
    #allocation18 [shape = 's32[1]{0}', space=sflag, size = 0x4, scoped, tag = 'scoped memory for tpu_custom_call.1']
    #allocation19 [shape = 'u8[16384]{0}', space=vmem, size = 0x4000, scoped, tag = 'output window, operand 0']
    %21 = vsyncpa [#allocation3], 0
    %s22 = scalar_lea.sflag [#allocation3], 1
    %23 = vsyncpa %s22, 0
    %24 = vsyncpa [#allocation6], 0
    %s25 = scalar_lea.sflag [#allocation6], 1
    %26 = vsyncpa %s25, 0
    %27 = vsyncpa [#allocation9], 0
    %s28 = scalar_lea.sflag [#allocation9], 1
    %29 = vsyncpa %s28, 0
    %30 = vsyncpa [#allocation12], 0
    %s31 = scalar_lea.sflag [#allocation12], 1
    %32 = vsyncpa %s31, 0
    %33 = vsyncpa [#allocation15], 0
    %34 = vsyncpa [#allocation18], 0
    %35 = vsyncpa [#allocation4], 0
    %s36 = scalar_lea.sflag [#allocation4], 1
    %37 = vsyncpa %s36, 0
    loop: start=0, step=1, limit=4
    $region2: #{tpu_custom_call.1} parent=1 // loop_pre_header
      _
    $region3: #{tpu_custom_call.1} parent=1 // loop_header
      %s39 = sphi 0, %s43
      %p40 = scmp.ge.s32.totalorder %s39, 4
      %s46 = sphi 0, %s58
      %s47 = sphi 0, %s54
      %s48 = sphi 0, %s46
      %s49 = sphi 0, %s47
      %s50 = sphi 0, %s48
      %s51 = sphi 0, %s49
      %s63 = sphi 0, %s65
      %s66 = sphi 0, %s63
      %s67 = sphi 0, %s66
      %s83 = sphi 0, %s67
      %s91 = sphi 0, %s93
      %s94 = sphi 0, %s91
      %s95 = sphi 0, %s94
      %s111 = sphi 0, %s95
      %s117 = sphi 0, %s119
      %s120 = sphi 0, %s117
      %s121 = sphi 0, %s120
      %s137 = sphi 0, %s121
      %s143 = sphi 0, %s145
      %s146 = sphi 0, %s143
      %s147 = sphi 0, %s146
      %s163 = sphi 0, %s147
      %s171 = sphi 0, %s173
      %s174 = sphi 0, %s171
      %s175 = sphi 0, %s174
      %s191 = sphi 0, %s175
      %s199 = sphi 0, %s201
      %s202 = sphi 0, %s199
      %s203 = sphi 0, %s202
      %s219 = sphi 0, %s203
      %s227 = sphi 0, %s229
      %s230 = sphi 0, %s227
      %s231 = sphi 0, %s230
      %s247 = sphi 0, %s231
      %s255 = sphi 0, %s257
      %s258 = sphi 0, %s255
      %s259 = sphi 0, %s258
      %s275 = sphi 0, %s259
      %s279 = sphi 0, %s279
      %s281 = sphi 0, %s279
      %s282 = sphi 0, %s281
      %s296 = sphi 0, %s282
      %s300 = sphi 0, %s300
      %s302 = sphi 0, %s300
      %s303 = sphi 0, %s302
      %s317 = sphi 0, %s303
      %s321 = sphi 0, %s321
      %s323 = sphi 0, %s321
      %s324 = sphi 0, %s323
      %s338 = sphi 0, %s324
      %s342 = sphi 0, %s342
      %s344 = sphi 0, %s342
      %s345 = sphi 0, %s344
      %s359 = sphi 0, %s345
      %s363 = sphi 0, %s363
      %s365 = sphi 0, %s363
      %s366 = sphi 0, %s365
      %s380 = sphi 0, %s366
      %s384 = sphi 0, %s384
      %s386 = sphi 0, %s384
      %s387 = sphi 0, %s386
      %s401 = sphi 0, %s387
      %s405 = sphi 0, %s405
      %s407 = sphi 0, %s405
      %s408 = sphi 0, %s407
      %s422 = sphi 0, %s408
      %s426 = sphi 0, %s426
      %s428 = sphi 0, %s426
      %s429 = sphi 0, %s428
      %s443 = sphi 0, %s429
      %s451 = sphi 0, %s453
      %s454 = sphi 0, %s451
      %s455 = sphi 0, %s454
      %s471 = sphi 0, %s455
    $region4: #{tpu_custom_call.1} parent=1 // loop_header_branch
      %42 = sbr.rel (%p40) target = $region8
    $region5: #{tpu_custom_call.1} parent=1 // loop_body
      %s44 = ssub.s32 %s39, 1
      %s45 = ssub.s32 %s39, 2
      %s52 = sadd.s32 1, %s47
      %p53 = scmp.ge.s32.totalorder %s52, 1
      %s54 = scalar_select %p53, 0, %s52
      %s55 = sadd.s32 1, %s46
      %s56 = scalar_select %p53, %s55, %s46
      %p57 = scmp.ge.s32.totalorder %s56, 2
      %s58 = scalar_select %p57, 0, %s56
      %s59 = ssub.s32 %s46, %s58
      %s60 = ssub.s32 %s47, %s54
      %s61 = sor.u32 %s59, %s60
      %p62 = scmp.eq.s32.totalorder %s61, 0
      %s64 = sadd.s32 %s63, 1
      %s65 = scalar_select %p62, %s63, %s64
      %p68 = pneg %p62
      %p69 = scmp.eq.s32.totalorder %s39, 1
      %p70 = por %p68, %p69
      %p71 = scmp.ne.s32.totalorder %s63, %s66
      %p72 = scmp.eq.s32.totalorder %s39, 0
      %p73 = por %p71, %p72
      %p74 = scmp.ne.s32.totalorder %s63, %s66
      %p75 = scmp.eq.s32.totalorder %s44, 1
      %p76 = por %p74, %p75
      %p77 = scmp.ne.s32.totalorder %s66, %s67
      %p78 = scmp.eq.s32.totalorder %s44, 0
      %p79 = por %p77, %p78
      %p80 = scmp.ne.s32.totalorder %s66, %s67
      %p81 = scmp.eq.s32.totalorder %s45, 1
      %p82 = por %p80, %p81
      %p84 = scmp.ne.s32.totalorder %s67, %s83
      %p85 = scmp.eq.s32.totalorder %s45, 0
      %p86 = por %p84, %p85
      %s87 = ssub.s32 %s46, %s58
      %s88 = ssub.s32 %s47, %s54
      %s89 = sor.u32 %s87, %s88
      %p90 = scmp.eq.s32.totalorder %s89, 0
      %s92 = sadd.s32 %s91, 1
      %s93 = scalar_select %p90, %s91, %s92
      %p96 = pneg %p90
      %p97 = scmp.eq.s32.totalorder %s39, 1
      %p98 = por %p96, %p97
      %p99 = scmp.ne.s32.totalorder %s91, %s94
      %p100 = scmp.eq.s32.totalorder %s39, 0
      %p101 = por %p99, %p100
      %p102 = scmp.ne.s32.totalorder %s91, %s94
      %p103 = scmp.eq.s32.totalorder %s44, 1
      %p104 = por %p102, %p103
      %p105 = scmp.ne.s32.totalorder %s94, %s95
      %p106 = scmp.eq.s32.totalorder %s44, 0
      %p107 = por %p105, %p106
      %p108 = scmp.ne.s32.totalorder %s94, %s95
      %p109 = scmp.eq.s32.totalorder %s45, 1
      %p110 = por %p108, %p109
      %p112 = scmp.ne.s32.totalorder %s95, %s111
      %p113 = scmp.eq.s32.totalorder %s45, 0
      %p114 = por %p112, %p113
      %s115 = ssub.s32 %s46, %s58
      %p116 = scmp.eq.s32.totalorder %s115, 0
      %s118 = sadd.s32 %s117, 1
      %s119 = scalar_select %p116, %s117, %s118
      %p122 = pneg %p116
      %p123 = scmp.eq.s32.totalorder %s39, 1
      %p124 = por %p122, %p123
      %p125 = scmp.ne.s32.totalorder %s117, %s120
      %p126 = scmp.eq.s32.totalorder %s39, 0
      %p127 = por %p125, %p126
      %p128 = scmp.ne.s32.totalorder %s117, %s120
      %p129 = scmp.eq.s32.totalorder %s44, 1
      %p130 = por %p128, %p129
      %p131 = scmp.ne.s32.totalorder %s120, %s121
      %p132 = scmp.eq.s32.totalorder %s44, 0
      %p133 = por %p131, %p132
      %p134 = scmp.ne.s32.totalorder %s120, %s121
      %p135 = scmp.eq.s32.totalorder %s45, 1
      %p136 = por %p134, %p135
      %p138 = scmp.ne.s32.totalorder %s121, %s137
      %p139 = scmp.eq.s32.totalorder %s45, 0
      %p140 = por %p138, %p139
      %s141 = ssub.s32 %s46, %s58
      %p142 = scmp.eq.s32.totalorder %s141, 0
      %s144 = sadd.s32 %s143, 1
      %s145 = scalar_select %p142, %s143, %s144
      %p148 = pneg %p142
      %p149 = scmp.eq.s32.totalorder %s39, 1
      %p150 = por %p148, %p149
      %p151 = scmp.ne.s32.totalorder %s143, %s146
      %p152 = scmp.eq.s32.totalorder %s39, 0
      %p153 = por %p151, %p152
      %p154 = scmp.ne.s32.totalorder %s143, %s146
      %p155 = scmp.eq.s32.totalorder %s44, 1
      %p156 = por %p154, %p155
      %p157 = scmp.ne.s32.totalorder %s146, %s147
      %p158 = scmp.eq.s32.totalorder %s44, 0
      %p159 = por %p157, %p158
      %p160 = scmp.ne.s32.totalorder %s146, %s147
      %p161 = scmp.eq.s32.totalorder %s45, 1
      %p162 = por %p160, %p161
      %p164 = scmp.ne.s32.totalorder %s147, %s163
      %p165 = scmp.eq.s32.totalorder %s45, 0
      %p166 = por %p164, %p165
      %s167 = ssub.s32 %s46, %s58
      %s168 = ssub.s32 %s47, %s54
      %s169 = sor.u32 %s167, %s168
      %p170 = scmp.eq.s32.totalorder %s169, 0
      %s172 = sadd.s32 %s171, 1
      %s173 = scalar_select %p170, %s171, %s172
      %p176 = pneg %p170
      %p177 = scmp.eq.s32.totalorder %s39, 1
      %p178 = por %p176, %p177
      %p179 = scmp.ne.s32.totalorder %s171, %s174
      %p180 = scmp.eq.s32.totalorder %s39, 0
      %p181 = por %p179, %p180
      %p182 = scmp.ne.s32.totalorder %s171, %s174
      %p183 = scmp.eq.s32.totalorder %s44, 1
      %p184 = por %p182, %p183
      %p185 = scmp.ne.s32.totalorder %s174, %s175
      %p186 = scmp.eq.s32.totalorder %s44, 0
      %p187 = por %p185, %p186
      %p188 = scmp.ne.s32.totalorder %s174, %s175
      %p189 = scmp.eq.s32.totalorder %s45, 1
      %p190 = por %p188, %p189
      %p192 = scmp.ne.s32.totalorder %s175, %s191
      %p193 = scmp.eq.s32.totalorder %s45, 0
      %p194 = por %p192, %p193
      %s195 = ssub.s32 %s46, %s58
      %s196 = ssub.s32 %s47, %s54
      %s197 = sor.u32 %s195, %s196
      %p198 = scmp.eq.s32.totalorder %s197, 0
      %s200 = sadd.s32 %s199, 1
      %s201 = scalar_select %p198, %s199, %s200
      %p204 = pneg %p198
      %p205 = scmp.eq.s32.totalorder %s39, 1
      %p206 = por %p204, %p205
      %p207 = scmp.ne.s32.totalorder %s199, %s202
      %p208 = scmp.eq.s32.totalorder %s39, 0
      %p209 = por %p207, %p208
      %p210 = scmp.ne.s32.totalorder %s199, %s202
      %p211 = scmp.eq.s32.totalorder %s44, 1
      %p212 = por %p210, %p211
      %p213 = scmp.ne.s32.totalorder %s202, %s203
      %p214 = scmp.eq.s32.totalorder %s44, 0
      %p215 = por %p213, %p214
      %p216 = scmp.ne.s32.totalorder %s202, %s203
      %p217 = scmp.eq.s32.totalorder %s45, 1
      %p218 = por %p216, %p217
      %p220 = scmp.ne.s32.totalorder %s203, %s219
      %p221 = scmp.eq.s32.totalorder %s45, 0
      %p222 = por %p220, %p221
      %s223 = ssub.s32 %s46, %s58
      %s224 = ssub.s32 %s47, %s54
      %s225 = sor.u32 %s223, %s224
      %p226 = scmp.eq.s32.totalorder %s225, 0
      %s228 = sadd.s32 %s227, 1
      %s229 = scalar_select %p226, %s227, %s228
      %p232 = pneg %p226
      %p233 = scmp.eq.s32.totalorder %s39, 1
      %p234 = por %p232, %p233
      %p235 = scmp.ne.s32.totalorder %s227, %s230
      %p236 = scmp.eq.s32.totalorder %s39, 0
      %p237 = por %p235, %p236
      %p238 = scmp.ne.s32.totalorder %s227, %s230
      %p239 = scmp.eq.s32.totalorder %s44, 1
      %p240 = por %p238, %p239
      %p241 = scmp.ne.s32.totalorder %s230, %s231
      %p242 = scmp.eq.s32.totalorder %s44, 0
      %p243 = por %p241, %p242
      %p244 = scmp.ne.s32.totalorder %s230, %s231
      %p245 = scmp.eq.s32.totalorder %s45, 1
      %p246 = por %p244, %p245
      %p248 = scmp.ne.s32.totalorder %s231, %s247
      %p249 = scmp.eq.s32.totalorder %s45, 0
      %p250 = por %p248, %p249
      %s251 = ssub.s32 %s46, %s58
      %s252 = ssub.s32 %s47, %s54
      %s253 = sor.u32 %s251, %s252
      %p254 = scmp.eq.s32.totalorder %s253, 0
      %s256 = sadd.s32 %s255, 1
      %s257 = scalar_select %p254, %s255, %s256
      %p260 = pneg %p254
      %p261 = scmp.eq.s32.totalorder %s39, 1
      %p262 = por %p260, %p261
      %p263 = scmp.ne.s32.totalorder %s255, %s258
      %p264 = scmp.eq.s32.totalorder %s39, 0
      %p265 = por %p263, %p264
      %p266 = scmp.ne.s32.totalorder %s255, %s258
      %p267 = scmp.eq.s32.totalorder %s44, 1
      %p268 = por %p266, %p267
      %p269 = scmp.ne.s32.totalorder %s258, %s259
      %p270 = scmp.eq.s32.totalorder %s44, 0
      %p271 = por %p269, %p270
      %p272 = scmp.ne.s32.totalorder %s258, %s259
      %p273 = scmp.eq.s32.totalorder %s45, 1
      %p274 = por %p272, %p273
      %p276 = scmp.ne.s32.totalorder %s259, %s275
      %p277 = scmp.eq.s32.totalorder %s45, 0
      %p278 = por %p276, %p277
      %s280 = sadd.s32 %s279, 1
      %p283 = scmp.eq.s32.totalorder %s39, 1
      %p284 = scmp.ne.s32.totalorder %s279, %s281
      %p285 = scmp.eq.s32.totalorder %s39, 0
      %p286 = por %p284, %p285
      %p287 = scmp.ne.s32.totalorder %s279, %s281
      %p288 = scmp.eq.s32.totalorder %s44, 1
      %p289 = por %p287, %p288
      %p290 = scmp.ne.s32.totalorder %s281, %s282
      %p291 = scmp.eq.s32.totalorder %s44, 0
      %p292 = por %p290, %p291
      %p293 = scmp.ne.s32.totalorder %s281, %s282
      %p294 = scmp.eq.s32.totalorder %s45, 1
      %p295 = por %p293, %p294
      %p297 = scmp.ne.s32.totalorder %s282, %s296
      %p298 = scmp.eq.s32.totalorder %s45, 0
      %p299 = por %p297, %p298
      %s301 = sadd.s32 %s300, 1
      %p304 = scmp.eq.s32.totalorder %s39, 1
      %p305 = scmp.ne.s32.totalorder %s300, %s302
      %p306 = scmp.eq.s32.totalorder %s39, 0
      %p307 = por %p305, %p306
      %p308 = scmp.ne.s32.totalorder %s300, %s302
      %p309 = scmp.eq.s32.totalorder %s44, 1
      %p310 = por %p308, %p309
      %p311 = scmp.ne.s32.totalorder %s302, %s303
      %p312 = scmp.eq.s32.totalorder %s44, 0
      %p313 = por %p311, %p312
      %p314 = scmp.ne.s32.totalorder %s302, %s303
      %p315 = scmp.eq.s32.totalorder %s45, 1
      %p316 = por %p314, %p315
      %p318 = scmp.ne.s32.totalorder %s303, %s317
      %p319 = scmp.eq.s32.totalorder %s45, 0
      %p320 = por %p318, %p319
      %s322 = sadd.s32 %s321, 1
      %p325 = scmp.eq.s32.totalorder %s39, 1
      %p326 = scmp.ne.s32.totalorder %s321, %s323
      %p327 = scmp.eq.s32.totalorder %s39, 0
      %p328 = por %p326, %p327
      %p329 = scmp.ne.s32.totalorder %s321, %s323
      %p330 = scmp.eq.s32.totalorder %s44, 1
      %p331 = por %p329, %p330
      %p332 = scmp.ne.s32.totalorder %s323, %s324
      %p333 = scmp.eq.s32.totalorder %s44, 0
      %p334 = por %p332, %p333
      %p335 = scmp.ne.s32.totalorder %s323, %s324
      %p336 = scmp.eq.s32.totalorder %s45, 1
      %p337 = por %p335, %p336
      %p339 = scmp.ne.s32.totalorder %s324, %s338
      %p340 = scmp.eq.s32.totalorder %s45, 0
      %p341 = por %p339, %p340
      %s343 = sadd.s32 %s342, 1
      %p346 = scmp.eq.s32.totalorder %s39, 1
      %p347 = scmp.ne.s32.totalorder %s342, %s344
      %p348 = scmp.eq.s32.totalorder %s39, 0
      %p349 = por %p347, %p348
      %p350 = scmp.ne.s32.totalorder %s342, %s344
      %p351 = scmp.eq.s32.totalorder %s44, 1
      %p352 = por %p350, %p351
      %p353 = scmp.ne.s32.totalorder %s344, %s345
      %p354 = scmp.eq.s32.totalorder %s44, 0
      %p355 = por %p353, %p354
      %p356 = scmp.ne.s32.totalorder %s344, %s345
      %p357 = scmp.eq.s32.totalorder %s45, 1
      %p358 = por %p356, %p357
      %p360 = scmp.ne.s32.totalorder %s345, %s359
      %p361 = scmp.eq.s32.totalorder %s45, 0
      %p362 = por %p360, %p361
      %s364 = sadd.s32 %s363, 1
      %p367 = scmp.eq.s32.totalorder %s39, 1
      %p368 = scmp.ne.s32.totalorder %s363, %s365
      %p369 = scmp.eq.s32.totalorder %s39, 0
      %p370 = por %p368, %p369
      %p371 = scmp.ne.s32.totalorder %s363, %s365
      %p372 = scmp.eq.s32.totalorder %s44, 1
      %p373 = por %p371, %p372
      %p374 = scmp.ne.s32.totalorder %s365, %s366
      %p375 = scmp.eq.s32.totalorder %s44, 0
      %p376 = por %p374, %p375
      %p377 = scmp.ne.s32.totalorder %s365, %s366
      %p378 = scmp.eq.s32.totalorder %s45, 1
      %p379 = por %p377, %p378
      %p381 = scmp.ne.s32.totalorder %s366, %s380
      %p382 = scmp.eq.s32.totalorder %s45, 0
      %p383 = por %p381, %p382
      %s385 = sadd.s32 %s384, 1
      %p388 = scmp.eq.s32.totalorder %s39, 1
      %p389 = scmp.ne.s32.totalorder %s384, %s386
      %p390 = scmp.eq.s32.totalorder %s39, 0
      %p391 = por %p389, %p390
      %p392 = scmp.ne.s32.totalorder %s384, %s386
      %p393 = scmp.eq.s32.totalorder %s44, 1
      %p394 = por %p392, %p393
      %p395 = scmp.ne.s32.totalorder %s386, %s387
      %p396 = scmp.eq.s32.totalorder %s44, 0
      %p397 = por %p395, %p396
      %p398 = scmp.ne.s32.totalorder %s386, %s387
      %p399 = scmp.eq.s32.totalorder %s45, 1
      %p400 = por %p398, %p399
      %p402 = scmp.ne.s32.totalorder %s387, %s401
      %p403 = scmp.eq.s32.totalorder %s45, 0
      %p404 = por %p402, %p403
      %s406 = sadd.s32 %s405, 1
      %p409 = scmp.eq.s32.totalorder %s39, 1
      %p410 = scmp.ne.s32.totalorder %s405, %s407
      %p411 = scmp.eq.s32.totalorder %s39, 0
      %p412 = por %p410, %p411
      %p413 = scmp.ne.s32.totalorder %s405, %s407
      %p414 = scmp.eq.s32.totalorder %s44, 1
      %p415 = por %p413, %p414
      %p416 = scmp.ne.s32.totalorder %s407, %s408
      %p417 = scmp.eq.s32.totalorder %s44, 0
      %p418 = por %p416, %p417
      %p419 = scmp.ne.s32.totalorder %s407, %s408
      %p420 = scmp.eq.s32.totalorder %s45, 1
      %p421 = por %p419, %p420
      %p423 = scmp.ne.s32.totalorder %s408, %s422
      %p424 = scmp.eq.s32.totalorder %s45, 0
      %p425 = por %p423, %p424
      %s427 = sadd.s32 %s426, 1
      %p430 = scmp.eq.s32.totalorder %s39, 1
      %p431 = scmp.ne.s32.totalorder %s426, %s428
      %p432 = scmp.eq.s32.totalorder %s39, 0
      %p433 = por %p431, %p432
      %p434 = scmp.ne.s32.totalorder %s426, %s428
      %p435 = scmp.eq.s32.totalorder %s44, 1
      %p436 = por %p434, %p435
      %p437 = scmp.ne.s32.totalorder %s428, %s429
      %p438 = scmp.eq.s32.totalorder %s44, 0
      %p439 = por %p437, %p438
      %p440 = scmp.ne.s32.totalorder %s428, %s429
      %p441 = scmp.eq.s32.totalorder %s45, 1
      %p442 = por %p440, %p441
      %p444 = scmp.ne.s32.totalorder %s429, %s443
      %p445 = scmp.eq.s32.totalorder %s45, 0
      %p446 = por %p444, %p445
      %s447 = ssub.s32 %s46, %s58
      %s448 = ssub.s32 %s47, %s54
      %s449 = sor.u32 %s447, %s448
      %p450 = scmp.eq.s32.totalorder %s449, 0
      %s452 = sadd.s32 %s451, 1
      %s453 = scalar_select %p450, %s451, %s452
      %p456 = pneg %p450
      %p457 = scmp.eq.s32.totalorder %s39, 1
      %p458 = por %p456, %p457
      %p459 = scmp.ne.s32.totalorder %s451, %s454
      %p460 = scmp.eq.s32.totalorder %s39, 0
      %p461 = por %p459, %p460
      %p462 = scmp.ne.s32.totalorder %s451, %s454
      %p463 = scmp.eq.s32.totalorder %s44, 1
      %p464 = por %p462, %p463
      %p465 = scmp.ne.s32.totalorder %s454, %s455
      %p466 = scmp.eq.s32.totalorder %s44, 0
      %p467 = por %p465, %p466
      %p468 = scmp.ne.s32.totalorder %s454, %s455
      %p469 = scmp.eq.s32.totalorder %s45, 1
      %p470 = por %p468, %p469
      %p472 = scmp.ne.s32.totalorder %s455, %s471
      %p473 = scmp.eq.s32.totalorder %s45, 0
      %p474 = por %p472, %p473
      %p475 = scmp.le.s32.totalorder 1, %s39
      %p476 = scmp.lt.s32.totalorder %s39, 3
      %p477 = pnand %p475, %p476
      %p478 = pneg %p477
      // Predicated region
      $region9: #{tpu_custom_call.1} parent=5 // pred_check
        _
      $region10: #{tpu_custom_call.1} parent=5 // pred_check_branch
        %480 = sbr.rel (%p477) target = $region12
      $region11: #{tpu_custom_call.1} parent=5 // pred_region
        %s481 = ssub.s32 %s39, 1
        // Predicated region
        $region13: #{tpu_custom_call.1} parent=11 // pred_check
          %p482 = pneg %p292
        $region14: #{tpu_custom_call.1} parent=11 // pred_check_branch
          %484 = sbr.rel (%p482) target = $region16
        $region15: #{tpu_custom_call.1} parent=11 // pred_region
          %s486 = ssub.s32 512, 512
          %487 = vsyncadd [#allocation12], %s486
          %s488 = sshll.u32 [#allocation13], 4
          %s489 = int_to_ptr.vmem [resolvable:$true] %s488
          %494 = dma.hbm_to_vmem [thread:$0]  %s8, 512, %s489, [#allocation12], 64, 64, 4
        $region16: #{tpu_custom_call.1} parent=11 // pred_fallthru
          _
        // Predicated region
        $region17: #{tpu_custom_call.1} parent=11 // pred_check
          %p495 = pneg %p313
        $region18: #{tpu_custom_call.1} parent=11 // pred_check_branch
          %497 = sbr.rel (%p495) target = $region20
        $region19: #{tpu_custom_call.1} parent=11 // pred_region
          _
        $region20: #{tpu_custom_call.1} parent=11 // pred_fallthru
          _
        // Predicated region
        $region21: #{tpu_custom_call.1} parent=11 // pred_check
          %p498 = pneg %p334
        $region22: #{tpu_custom_call.1} parent=11 // pred_check_branch
          %500 = sbr.rel (%p498) target = $region24
        $region23: #{tpu_custom_call.1} parent=11 // pred_region
          _
        $region24: #{tpu_custom_call.1} parent=11 // pred_fallthru
          _
        // Predicated region
        $region25: #{tpu_custom_call.1} parent=11 // pred_check
          %p501 = pneg %p355
        $region26: #{tpu_custom_call.1} parent=11 // pred_check_branch
          %503 = sbr.rel (%p501) target = $region28
        $region27: #{tpu_custom_call.1} parent=11 // pred_region
          %s505 = ssub.s32 256, 256
          %506 = vsyncadd [#allocation15], %s505
          %s507 = sshll.u32 [#allocation14], 4
          %s508 = int_to_ptr.vmem [resolvable:$true] %s507
          %513 = dma.hbm_to_vmem [thread:$0]  %s11, 256, %s508, [#allocation15], 64, 64, 4
        $region28: #{tpu_custom_call.1} parent=11 // pred_fallthru
          _
        // Predicated region
        $region29: #{tpu_custom_call.1} parent=11 // pred_check
          %p514 = pneg %p376
        $region30: #{tpu_custom_call.1} parent=11 // pred_check_branch
          %516 = sbr.rel (%p514) target = $region32
        $region31: #{tpu_custom_call.1} parent=11 // pred_region
          %s518 = ssub.s32 1536, 1536
          %519 = vsyncadd [#allocation15], %s518
          %s520 = sshll.u32 [#allocation16], 4
          %s521 = int_to_ptr.vmem [resolvable:$true] %s520
          %526 = dma.hbm_to_vmem [thread:$0]  %s12, 1536, %s521, [#allocation15], 64, 64, 4
        $region32: #{tpu_custom_call.1} parent=11 // pred_fallthru
          _
        // Predicated region
        $region33: #{tpu_custom_call.1} parent=11 // pred_check
          %p527 = pneg %p397
        $region34: #{tpu_custom_call.1} parent=11 // pred_check_branch
          %529 = sbr.rel (%p527) target = $region36
        $region35: #{tpu_custom_call.1} parent=11 // pred_region
          %s531 = ssub.s32 16, 16
          %532 = vsyncadd [#allocation18], %s531
          %s534 = sshll.u32 [#allocation17], 4
          %s535 = int_to_ptr.vmem [resolvable:$true] %s534
          %537 = dma.hbm_to_vmem [thread:$0]  %s13, 16, %s535, [#allocation18]
        $region36: #{tpu_custom_call.1} parent=11 // pred_fallthru
          _
        // Predicated region
        $region37: #{tpu_custom_call.1} parent=11 // pred_check
          %p538 = pneg %p418
        $region38: #{tpu_custom_call.1} parent=11 // pred_check_branch
          %540 = sbr.rel (%p538) target = $region40
        $region39: #{tpu_custom_call.1} parent=11 // pred_region
          _
        $region40: #{tpu_custom_call.1} parent=11 // pred_fallthru
          _
        // Predicated region
        $region41: #{tpu_custom_call.1} parent=11 // pred_check
          %p541 = pneg %p439
        $region42: #{tpu_custom_call.1} parent=11 // pred_check_branch
          %543 = sbr.rel (%p541) target = $region44
        $region43: #{tpu_custom_call.1} parent=11 // pred_region
          _
        $region44: #{tpu_custom_call.1} parent=11 // pred_fallthru
          _
      $region12: #{tpu_custom_call.1} parent=5 // pred_fallthru
        _
      %p544 = scmp.lt.s32.totalorder %s39, 2
      // Predicated region
      $region45: #{tpu_custom_call.1} parent=5 // pred_check
        %p545 = pneg %p544
      $region46: #{tpu_custom_call.1} parent=5 // pred_check_branch
        %547 = sbr.rel (%p545) target = $region48
      $region47: #{tpu_custom_call.1} parent=5 // pred_region
        // Predicated region
        $region49: #{tpu_custom_call.1} parent=47 // pred_check
          %p548 = pneg %p73
        $region50: #{tpu_custom_call.1} parent=47 // pred_check_branch
          %550 = sbr.rel (%p548) target = $region52
        $region51: #{tpu_custom_call.1} parent=47 // pred_region
          %s551 = sand.u32 %s63, 1
          %s552 = scalar_lea.sflag [#allocation3], %s551
          %s553 = sand.u32 %s63, 1
          %s554 = smul.addr %s553, 16
          %s555 = scalar_lea.vmem [#allocation2], %s554
          %s556 = smul.u32 2, %s47
          %s558 = ssub.s32 256, 256
          %559 = vsyncadd %s552, %s558
          %s560 = smul.addr %s46, 2
          %s561 = sadd.s32 %s556, %s560
          %s562 = smul.addr %s561, 128
          %s563 = scalar_lea.hbm %s0, %s562
          %s564 = sshll.u32 %s555, 4
          %s565 = int_to_ptr.vmem [resolvable:$true] %s564
          %570 = dma.hbm_to_vmem [thread:$0]  %s563, 256, %s565, %s552, 128, 128, 8
        $region52: #{tpu_custom_call.1} parent=47 // pred_fallthru
          _
        // Predicated region
        $region53: #{tpu_custom_call.1} parent=47 // pred_check
          %p571 = pneg %p101
        $region54: #{tpu_custom_call.1} parent=47 // pred_check_branch
          %573 = sbr.rel (%p571) target = $region56
        $region55: #{tpu_custom_call.1} parent=47 // pred_region
          %s574 = sand.u32 %s39, 1
          %s575 = scalar_lea.sflag [#allocation6], %s574
          %s576 = sand.u32 %s91, 1
          %s577 = smul.addr %s576, 16
          %s578 = scalar_lea.vmem [#allocation5], %s577
          %s579 = smul.u32 2, %s47
          %s581 = ssub.s32 256, 256
          %582 = vsyncadd %s575, %s581
          %s583 = smul.addr %s46, 2
          %s584 = sadd.s32 %s579, %s583
          %s585 = smul.addr %s584, 128
          %s586 = scalar_lea.hbm %s1, %s585
          %s587 = sshll.u32 %s578, 4
          %s588 = int_to_ptr.vmem [resolvable:$true] %s587
          %593 = dma.hbm_to_vmem [thread:$0]  %s586, 256, %s588, %s575, 128, 128, 8
        $region56: #{tpu_custom_call.1} parent=47 // pred_fallthru
          _
        // Predicated region
        $region57: #{tpu_custom_call.1} parent=47 // pred_check
          %p594 = pneg %p127
        $region58: #{tpu_custom_call.1} parent=47 // pred_check_branch
          %596 = sbr.rel (%p594) target = $region60
        $region59: #{tpu_custom_call.1} parent=47 // pred_region
          %p597 = scmp.lt.s32.totalorder %s46, 1
          %s598 = scalar_select %p597, %s46, 1
          %s599 = scalar_lea.vmem %s2, %s598
        $region60: #{tpu_custom_call.1} parent=47 // pred_fallthru
          _
        // Predicated region
        $region61: #{tpu_custom_call.1} parent=47 // pred_check
          %p600 = pneg %p153
        $region62: #{tpu_custom_call.1} parent=47 // pred_check_branch
          %602 = sbr.rel (%p600) target = $region64
        $region63: #{tpu_custom_call.1} parent=47 // pred_region
          %p603 = scmp.lt.s32.totalorder %s46, 1
          %s604 = scalar_select %p603, %s46, 1
          %s605 = scalar_lea.vmem %s3, %s604
        $region64: #{tpu_custom_call.1} parent=47 // pred_fallthru
          _
        // Predicated region
        $region65: #{tpu_custom_call.1} parent=47 // pred_check
          %p606 = pneg %p181
        $region66: #{tpu_custom_call.1} parent=47 // pred_check_branch
          %608 = sbr.rel (%p606) target = $region68
        $region67: #{tpu_custom_call.1} parent=47 // pred_region
          %s609 = sand.u32 %s39, 1
          %s610 = scalar_lea.sflag [#allocation6], %s609
          %s611 = sand.u32 %s171, 1
          %s612 = scalar_lea.vmem [#allocation7], %s611
          %s614 = ssub.s32 16, 16
          %615 = vsyncadd %s610, %s614
          %s616 = sadd.s32 %s47, %s46
          %s617 = smul.addr %s616, 16
          %s618 = scalar_lea.hbm %s4, %s617
          %s620 = sshll.u32 %s612, 4
          %s621 = int_to_ptr.vmem [resolvable:$true] %s620
          %623 = dma.hbm_to_vmem [thread:$0]  %s618, 16, %s621, %s610
        $region68: #{tpu_custom_call.1} parent=47 // pred_fallthru
          _
        // Predicated region
        $region69: #{tpu_custom_call.1} parent=47 // pred_check
          %p624 = pneg %p209
        $region70: #{tpu_custom_call.1} parent=47 // pred_check_branch
          %626 = sbr.rel (%p624) target = $region72
        $region71: #{tpu_custom_call.1} parent=47 // pred_region
          %s627 = sand.u32 %s39, 1
          %s628 = scalar_lea.sflag [#allocation9], %s627
          %s629 = sand.u32 %s199, 1
          %s630 = scalar_lea.vmem [#allocation8], %s629
          %s632 = ssub.s32 16, 16
          %633 = vsyncadd %s628, %s632
          %s634 = sadd.s32 %s47, %s46
          %s635 = smul.addr %s634, 16
          %s636 = scalar_lea.hbm %s5, %s635
          %s638 = sshll.u32 %s630, 4
          %s639 = int_to_ptr.vmem [resolvable:$true] %s638
          %641 = dma.hbm_to_vmem [thread:$0]  %s636, 16, %s639, %s628
        $region72: #{tpu_custom_call.1} parent=47 // pred_fallthru
          _
        // Predicated region
        $region73: #{tpu_custom_call.1} parent=47 // pred_check
          %p642 = pneg %p237
        $region74: #{tpu_custom_call.1} parent=47 // pred_check_branch
          %644 = sbr.rel (%p642) target = $region76
        $region75: #{tpu_custom_call.1} parent=47 // pred_region
          %s645 = sand.u32 %s39, 1
          %s646 = scalar_lea.sflag [#allocation9], %s645
          %s647 = sand.u32 %s227, 1
          %s648 = scalar_lea.vmem [#allocation10], %s647
          %s650 = ssub.s32 16, 16
          %651 = vsyncadd %s646, %s650
          %s652 = sadd.s32 %s47, %s46
          %s653 = smul.addr %s652, 16
          %s654 = scalar_lea.hbm %s6, %s653
          %s656 = sshll.u32 %s648, 4
          %s657 = int_to_ptr.vmem [resolvable:$true] %s656
          %659 = dma.hbm_to_vmem [thread:$0]  %s654, 16, %s657, %s646
        $region76: #{tpu_custom_call.1} parent=47 // pred_fallthru
          _
        // Predicated region
        $region77: #{tpu_custom_call.1} parent=47 // pred_check
          %p660 = pneg %p265
        $region78: #{tpu_custom_call.1} parent=47 // pred_check_branch
          %662 = sbr.rel (%p660) target = $region80
        $region79: #{tpu_custom_call.1} parent=47 // pred_region
          %s663 = sand.u32 %s39, 1
          %s664 = scalar_lea.sflag [#allocation12], %s663
          %s665 = sand.u32 %s255, 1
          %s666 = scalar_lea.vmem [#allocation11], %s665
          %s668 = ssub.s32 16, 16
          %669 = vsyncadd %s664, %s668
          %s670 = sadd.s32 %s47, %s46
          %s671 = smul.addr %s670, 16
          %s672 = scalar_lea.hbm %s7, %s671
          %s674 = sshll.u32 %s666, 4
          %s675 = int_to_ptr.vmem [resolvable:$true] %s674
          %677 = dma.hbm_to_vmem [thread:$0]  %s672, 16, %s675, %s664
        $region80: #{tpu_custom_call.1} parent=47 // pred_fallthru
          _
      $region48: #{tpu_custom_call.1} parent=5 // pred_fallthru
        _
      %p678 = scmp.le.s32.totalorder 1, %s39
      %p679 = scmp.lt.s32.totalorder %s39, 3
      %p680 = pnand %p678, %p679
      %p681 = pneg %p680
      // Predicated region
      $region81: #{tpu_custom_call.1} parent=5 // pred_check
        _
      $region82: #{tpu_custom_call.1} parent=5 // pred_check_branch
        %683 = sbr.rel (%p680) target = $region84
      $region83: #{tpu_custom_call.1} parent=5 // pred_region
        %s684 = ssub.s32 %s39, 1
        %s685 = sand.u32 %s66, 1
        %s686 = scalar_lea.sflag [#allocation3], %s685
        %s687 = sand.u32 %s66, 1
        %s688 = smul.addr %s687, 16
        %s689 = scalar_lea.vmem [#allocation2], %s688
        // Predicated region
        $region85: #{tpu_custom_call.1} parent=83 // pred_check
          %p690 = pneg %p79
        $region86: #{tpu_custom_call.1} parent=83 // pred_check_branch
          %692 = sbr.rel (%p690) target = $region88
        $region87: #{tpu_custom_call.1} parent=83 // pred_region
          %693 = dma.done %s686, 256
        $region88: #{tpu_custom_call.1} parent=83 // pred_fallthru
          _
        %s694 = sand.u32 %s44, 1
        %s695 = scalar_lea.sflag [#allocation6], %s694
        %s696 = sand.u32 %s94, 1
        %s697 = smul.addr %s696, 16
        %s698 = scalar_lea.vmem [#allocation5], %s697
        // Predicated region
        $region89: #{tpu_custom_call.1} parent=83 // pred_check
          %p699 = pneg %p107
        $region90: #{tpu_custom_call.1} parent=83 // pred_check_branch
          %701 = sbr.rel (%p699) target = $region92
        $region91: #{tpu_custom_call.1} parent=83 // pred_region
          %702 = dma.done %s695, 256
        $region92: #{tpu_custom_call.1} parent=83 // pred_fallthru
          _
        %s703 = sand.u32 %s44, 1
        %s704 = scalar_lea.sflag [#allocation6], %s703
        %s705 = sand.u32 %s174, 1
        %s706 = scalar_lea.vmem [#allocation7], %s705
        // Predicated region
        $region93: #{tpu_custom_call.1} parent=83 // pred_check
          %p707 = pneg %p187
        $region94: #{tpu_custom_call.1} parent=83 // pred_check_branch
          %709 = sbr.rel (%p707) target = $region96
        $region95: #{tpu_custom_call.1} parent=83 // pred_region
          %710 = dma.done %s704, 16
        $region96: #{tpu_custom_call.1} parent=83 // pred_fallthru
          _
        %s711 = sand.u32 %s44, 1
        %s712 = scalar_lea.sflag [#allocation9], %s711
        %s713 = sand.u32 %s202, 1
        %s714 = scalar_lea.vmem [#allocation8], %s713
        // Predicated region
        $region97: #{tpu_custom_call.1} parent=83 // pred_check
          %p715 = pneg %p215
        $region98: #{tpu_custom_call.1} parent=83 // pred_check_branch
          %717 = sbr.rel (%p715) target = $region100
        $region99: #{tpu_custom_call.1} parent=83 // pred_region
          %718 = dma.done %s712, 16
        $region100: #{tpu_custom_call.1} parent=83 // pred_fallthru
          _
        %s719 = sand.u32 %s44, 1
        %s720 = scalar_lea.sflag [#allocation9], %s719
        %s721 = sand.u32 %s230, 1
        %s722 = scalar_lea.vmem [#allocation10], %s721
        // Predicated region
        $region101: #{tpu_custom_call.1} parent=83 // pred_check
          %p723 = pneg %p243
        $region102: #{tpu_custom_call.1} parent=83 // pred_check_branch
          %725 = sbr.rel (%p723) target = $region104
        $region103: #{tpu_custom_call.1} parent=83 // pred_region
          %726 = dma.done %s720, 16
        $region104: #{tpu_custom_call.1} parent=83 // pred_fallthru
          _
        %s727 = sand.u32 %s44, 1
        %s728 = scalar_lea.sflag [#allocation12], %s727
        %s729 = sand.u32 %s258, 1
        %s730 = scalar_lea.vmem [#allocation11], %s729
        // Predicated region
        $region105: #{tpu_custom_call.1} parent=83 // pred_check
          %p731 = pneg %p271
        $region106: #{tpu_custom_call.1} parent=83 // pred_check_branch
          %733 = sbr.rel (%p731) target = $region108
        $region107: #{tpu_custom_call.1} parent=83 // pred_region
          %734 = dma.done %s728, 16
        $region108: #{tpu_custom_call.1} parent=83 // pred_fallthru
          _
        // Predicated region
        $region109: #{tpu_custom_call.1} parent=83 // pred_check
          %p735 = pneg %p292
        $region110: #{tpu_custom_call.1} parent=83 // pred_check_branch
          %737 = sbr.rel (%p735) target = $region112
        $region111: #{tpu_custom_call.1} parent=83 // pred_region
          %738 = dma.done [#allocation12], 512
        $region112: #{tpu_custom_call.1} parent=83 // pred_fallthru
          _
        // Predicated region
        $region113: #{tpu_custom_call.1} parent=83 // pred_check
          %p739 = pneg %p355
        $region114: #{tpu_custom_call.1} parent=83 // pred_check_branch
          %741 = sbr.rel (%p739) target = $region116
        $region115: #{tpu_custom_call.1} parent=83 // pred_region
          %742 = dma.done [#allocation15], 256
        $region116: #{tpu_custom_call.1} parent=83 // pred_fallthru
          _
        // Predicated region
        $region117: #{tpu_custom_call.1} parent=83 // pred_check
          %p743 = pneg %p376
        $region118: #{tpu_custom_call.1} parent=83 // pred_check_branch
          %745 = sbr.rel (%p743) target = $region120
        $region119: #{tpu_custom_call.1} parent=83 // pred_region
          %746 = dma.done [#allocation15], 1536
        $region120: #{tpu_custom_call.1} parent=83 // pred_fallthru
          _
        // Predicated region
        $region121: #{tpu_custom_call.1} parent=83 // pred_check
          %p747 = pneg %p397
        $region122: #{tpu_custom_call.1} parent=83 // pred_check_branch
          %749 = sbr.rel (%p747) target = $region124
        $region123: #{tpu_custom_call.1} parent=83 // pred_region
          %750 = dma.done [#allocation18], 16
        $region124: #{tpu_custom_call.1} parent=83 // pred_fallthru
          _
        %s751 = sand.u32 %s66, 1
        %s752 = scalar_lea.sflag [#allocation3], %s751
        %s753 = sand.u32 %s66, 1
        %s754 = smul.addr %s753, 16
        %s755 = scalar_lea.vmem [#allocation2], %s754
        %p756 = pneg %p79
        %p757 = pneg %p76
        %s758 = sand.u32 %s44, 1
        %s759 = scalar_lea.sflag [#allocation6], %s758
        %s760 = sand.u32 %s94, 1
        %s761 = smul.addr %s760, 16
        %s762 = scalar_lea.vmem [#allocation5], %s761
        %p763 = pneg %p107
        %p764 = pneg %p104
        %p765 = scmp.lt.s32.totalorder %s48, 1
        %s766 = scalar_select %p765, %s48, 1
        %s767 = scalar_lea.vmem %s2, %s766
        %p768 = pneg %p133
        %p769 = pneg %p130
        %p770 = scmp.lt.s32.totalorder %s48, 1
        %s771 = scalar_select %p770, %s48, 1
        %s772 = scalar_lea.vmem %s3, %s771
        %p773 = pneg %p159
        %p774 = pneg %p156
        %s775 = sand.u32 %s44, 1
        %s776 = scalar_lea.sflag [#allocation6], %s775
        %s777 = sand.u32 %s174, 1
        %s778 = scalar_lea.vmem [#allocation7], %s777
        %p779 = pneg %p187
        %p780 = pneg %p184
        %s781 = sand.u32 %s44, 1
        %s782 = scalar_lea.sflag [#allocation9], %s781
        %s783 = sand.u32 %s202, 1
        %s784 = scalar_lea.vmem [#allocation8], %s783
        %p785 = pneg %p215
        %p786 = pneg %p212
        %s787 = sand.u32 %s44, 1
        %s788 = scalar_lea.sflag [#allocation9], %s787
        %s789 = sand.u32 %s230, 1
        %s790 = scalar_lea.vmem [#allocation10], %s789
        %p791 = pneg %p243
        %p792 = pneg %p240
        %s793 = sand.u32 %s44, 1
        %s794 = scalar_lea.sflag [#allocation12], %s793
        %s795 = sand.u32 %s258, 1
        %s796 = scalar_lea.vmem [#allocation11], %s795
        %p797 = pneg %p271
        %p798 = pneg %p268
        %p799 = pneg %p292
        %p800 = pneg %p289
        %p801 = pneg %p313
        %p802 = pneg %p310
        %p803 = pneg %p334
        %p804 = pneg %p331
        %p805 = pneg %p355
        %p806 = pneg %p352
        %p807 = pneg %p376
        %p808 = pneg %p373
        %p809 = pneg %p397
        %p810 = pneg %p394
        %p811 = pneg %p418
        %p812 = pneg %p415
        %p813 = pneg %p439
        %p814 = pneg %p436
        %p815 = pneg %p467
        %p816 = pneg %p464
        %s817 = sand.u32 %s454, 1
        %s818 = scalar_lea.sflag [#allocation4], %s817
        %s819 = sand.u32 %s454, 1
        %s820 = smul.addr %s819, 16
        %s821 = scalar_lea.vmem [#allocation19], %s820
        %s822 = smul.u32 2, %s49
        %s823 = smul.u32 2, %s49
        %p824 = scmp.lt.s32.totalorder %s48, 1
        %s825 = scalar_select %p824, %s48, 1
        %s826 = scalar_lea.vmem %s2, %s825
        %p827 = scmp.lt.s32.totalorder %s48, 1
        %s828 = scalar_select %p827, %s48, 1
        %s829 = scalar_lea.vmem %s3, %s828
        %s830 = smul.u32 2, %s49
        %v832 = vld [vmem:[%s689] sm:$0xff]
        %v833 = vld [vmem:[%s689 + $0x8] sm:$0xff]
        %v834 = vld [vmem:[%s698] sm:$0xff]
        %v835 = vld [vmem:[%s698 + $0x8] sm:$0xff]
        %v836 = vld [vmem:[%s826] sm:$0x1]
        %v837 = vld [vmem:[%s829] sm:$0x1]
        %v838 = vld [vmem:[%s706] sm:$0x1]
        %v839 = vld [vmem:[%s714] sm:$0x1]
        %v840 = vld [vmem:[%s722] sm:$0x1]
        %v841 = vld [vmem:[%s730] sm:$0x1]
        %v842 = vld [vmem:[%s9] sm:$0xf]
        %v843 = vld [vmem:[%s9 + $0x4] sm:$0xf]
        %v844 = vld [vmem:[%s9 + $0x8] sm:$0xf]
        %v845 = vld [vmem:[%s9 + $0xc] sm:$0xf]
        %v846 = vld [vmem:[%s10] sm:$0x1]
        %v847 = vpack.c.bf16 %v836, %v836
        %v848 = vld [vmem:[#allocation13] sm:$0xf]
        %v849 = vld [vmem:[#allocation13 + $0x4] sm:$0xf]
        %v850 = vld [vmem:[#allocation13 + $0x8] sm:$0xf]
        %v851 = vld [vmem:[#allocation13 + $0xc] sm:$0xf]
        %v852 = vld [vmem:[#allocation13 + $0x10] sm:$0xf]
        %v853 = vld [vmem:[#allocation13 + $0x14] sm:$0xf]
        %v854 = vld [vmem:[#allocation13 + $0x18] sm:$0xf]
        %v855 = vld [vmem:[#allocation13 + $0x1c] sm:$0xf]
        %v864 = vunpack.c.l.b16 %v848
        %v865 = vunpack.c.l.b16 %v849
        %v866 = vunpack.c.l.b16 %v850
        %v867 = vunpack.c.l.b16 %v851
        %v868 = vunpack.c.l.b16 %v852
        %v869 = vunpack.c.l.b16 %v853
        %v870 = vunpack.c.l.b16 %v854
        %v871 = vunpack.c.l.b16 %v855
        %v872 = vpack.c.b16 %v865, %v864
        %v873 = vpack.c.b16 %v867, %v866
        %v874 = vpack.c.b16 %v869, %v868
        %v875 = vpack.c.b16 %v871, %v870
        %vm880 = vcmask 523264
        %v882 = vsel %vm880, %v847, 0
        %884 = vmatprep.subr.bf16.mxu0 0
        %885 = vmatpush1.bf16.msra.mxu0 %v872
        %886 = vmatprep.subr.bf16.mxu0 0
        %887 = vmatpush1.bf16.msra.mxu0 %v873
        %888 = vmatprep.subr.bf16.mxu0 0
        %889 = vmatpush1.bf16.msra.mxu0 %v874
        %890 = vmatprep.subr.bf16.mxu0 0
        %891 = vmatpush1.bf16.msra.mxu0 %v875
        %892 = vmatprep.subr.bf16.mxu0 0
        %893 = vmatpush1.bf16.msra.mxu0 0
        %894 = vmatprep.subr.bf16.mxu0 0
        %895 = vmatpush1.bf16.msra.mxu0 0
        %896 = vmatprep.subr.bf16.mxu0 0
        %897 = vmatpush1.bf16.msra.mxu0 0
        %898 = vmatprep.subr.bf16.mxu0 0
        %899 = vmatpush1.bf16.msra.mxu0 0
        %900 = vmatprep.subr.bf16.mxu0 0
        %901 = vmatpush1.bf16.msra.mxu0 0
        %902 = vmatprep.subr.bf16.mxu0 0
        %903 = vmatpush1.bf16.msra.mxu0 0
        %904 = vmatprep.subr.bf16.mxu0 0
        %905 = vmatpush1.bf16.msra.mxu0 0
        %906 = vmatprep.subr.bf16.mxu0 0
        %907 = vmatpush1.bf16.msra.mxu0 0
        %908 = vmatprep.subr.bf16.mxu0 0
        %909 = vmatpush1.bf16.msra.mxu0 0
        %910 = vmatprep.subr.bf16.mxu0 0
        %911 = vmatpush1.bf16.msra.mxu0 0
        %912 = vmatprep.subr.bf16.mxu0 0
        %913 = vmatpush1.bf16.msra.mxu0 0
        %914 = vmatprep.subr.bf16.mxu0 0
        %915 = vmatpush1.bf16.msra.mxu0 0
        %916 = vmatprep.mubr.bf16.mxu0 0
        %917 = vmatmul.mubr.bf16.gmra.mrb[0].mxu0 %v882
        %v918 = vpop.f32.mrb[0].mxu0
        %v919 = vadd.f32 0.0, %v918
        %v920 = vpop.f32.mrb[0].mxu0
        %v921 = vpop.f32.mrb[0].mxu0
        %v922 = vpop.f32.mrb[0].mxu0
        %923 = vdwg.mxu0
        %v924 = vpack.c.bf16 %v837, %v837
        %v925 = vld [vmem:[#allocation14] sm:$0xf]
        %v926 = vld [vmem:[#allocation14 + $0x4] sm:$0xf]
        %v927 = vld [vmem:[#allocation14 + $0x8] sm:$0xf]
        %v928 = vld [vmem:[#allocation14 + $0xc] sm:$0xf]
        %v933 = vunpack.c.l.b16 %v925
        %v934 = vunpack.c.l.b16 %v926
        %v935 = vunpack.c.l.b16 %v927
        %v936 = vunpack.c.l.b16 %v928
        %v937 = vpack.c.b16 %v934, %v933
        %v938 = vpack.c.b16 %v936, %v935
        %vm941 = vcmask 261120
        %v943 = vsel %vm941, %v924, 0
        %945 = vmatprep.subr.bf16.mxu0 0
        %946 = vmatpush1.bf16.msra.mxu0 %v937
        %947 = vmatprep.subr.bf16.mxu0 0
        %948 = vmatpush1.bf16.msra.mxu0 %v938
        %949 = vmatprep.subr.bf16.mxu0 0
        %950 = vmatpush1.bf16.msra.mxu0 0
        %951 = vmatprep.subr.bf16.mxu0 0
        %952 = vmatpush1.bf16.msra.mxu0 0
        %953 = vmatprep.subr.bf16.mxu0 0
        %954 = vmatpush1.bf16.msra.mxu0 0
        %955 = vmatprep.subr.bf16.mxu0 0
        %956 = vmatpush1.bf16.msra.mxu0 0
        %957 = vmatprep.subr.bf16.mxu0 0
        %958 = vmatpush1.bf16.msra.mxu0 0
        %959 = vmatprep.subr.bf16.mxu0 0
        %960 = vmatpush1.bf16.msra.mxu0 0
        %961 = vmatprep.subr.bf16.mxu0 0
        %962 = vmatpush1.bf16.msra.mxu0 0
        %963 = vmatprep.subr.bf16.mxu0 0
        %964 = vmatpush1.bf16.msra.mxu0 0
        %965 = vmatprep.subr.bf16.mxu0 0
        %966 = vmatpush1.bf16.msra.mxu0 0
        %967 = vmatprep.subr.bf16.mxu0 0
        %968 = vmatpush1.bf16.msra.mxu0 0
        %969 = vmatprep.subr.bf16.mxu0 0
        %970 = vmatpush1.bf16.msra.mxu0 0
        %971 = vmatprep.subr.bf16.mxu0 0
        %972 = vmatpush1.bf16.msra.mxu0 0
        %973 = vmatprep.subr.bf16.mxu0 0
        %974 = vmatpush1.bf16.msra.mxu0 0
        %975 = vmatprep.subr.bf16.mxu0 0
        %976 = vmatpush1.bf16.msra.mxu0 0
        %977 = vmatprep.mubr.bf16.mxu0 0
        %978 = vmatmul.mubr.bf16.gmra.mrb[0].mxu0 %v943
        %v979 = vpop.f32.mrb[0].mxu0
        %v980 = vadd.f32 0.0, %v979
        %v981 = vpop.f32.mrb[0].mxu0
        %v982 = vpop.f32.mrb[0].mxu0
        %v983 = vpop.f32.mrb[0].mxu0
        %984 = vdwg.mxu0
        %v985 = vadd.f32 %v919, %v980
        %v986 = vadd.f32 %v985, %v846
        %v987 = vpack.c.bf16 %v835, %v834
        %v992 = vunpack.c.l.b16 %v842
        %v993 = vunpack.c.l.b16 %v843
        %v994 = vunpack.c.l.b16 %v844
        %v995 = vunpack.c.l.b16 %v845
        %v996 = vpack.c.b16 %v993, %v992
        %v997 = vpack.c.b16 %v995, %v994
        %v1001 = vsel %vm941, %v987, 0
        %1003 = vmatprep.subr.bf16.mxu0 0
        %1004 = vmatpush1.bf16.msra.mxu0 %v996
        %1005 = vmatprep.subr.bf16.mxu0 0
        %1006 = vmatpush1.bf16.msra.mxu0 %v997
        %1007 = vmatprep.subr.bf16.mxu0 0
        %1008 = vmatpush1.bf16.msra.mxu0 0
        %1009 = vmatprep.subr.bf16.mxu0 0
        %1010 = vmatpush1.bf16.msra.mxu0 0
        %1011 = vmatprep.subr.bf16.mxu0 0
        %1012 = vmatpush1.bf16.msra.mxu0 0
        %1013 = vmatprep.subr.bf16.mxu0 0
        %1014 = vmatpush1.bf16.msra.mxu0 0
        %1015 = vmatprep.subr.bf16.mxu0 0
        %1016 = vmatpush1.bf16.msra.mxu0 0
        %1017 = vmatprep.subr.bf16.mxu0 0
        %1018 = vmatpush1.bf16.msra.mxu0 0
        %1019 = vmatprep.subr.bf16.mxu0 0
        %1020 = vmatpush1.bf16.msra.mxu0 0
        %1021 = vmatprep.subr.bf16.mxu0 0
        %1022 = vmatpush1.bf16.msra.mxu0 0
        %1023 = vmatprep.subr.bf16.mxu0 0
        %1024 = vmatpush1.bf16.msra.mxu0 0
        %1025 = vmatprep.subr.bf16.mxu0 0
        %1026 = vmatpush1.bf16.msra.mxu0 0
        %1027 = vmatprep.subr.bf16.mxu0 0
        %1028 = vmatpush1.bf16.msra.mxu0 0
        %1029 = vmatprep.subr.bf16.mxu0 0
        %1030 = vmatpush1.bf16.msra.mxu0 0
        %1031 = vmatprep.subr.bf16.mxu0 0
        %1032 = vmatpush1.bf16.msra.mxu0 0
        %1033 = vmatprep.subr.bf16.mxu0 0
        %1034 = vmatpush1.bf16.msra.mxu0 0
        %1035 = vmatprep.mubr.bf16.mxu0 0
        %1036 = vmatmul.mubr.bf16.gmra.mrb[0].mxu0 %v1001
        %v1037 = vpop.f32.mrb[0].mxu0
        %v1038 = vadd.f32 0.0, %v1037
        %v1039 = vpop.f32.mrb[0].mxu0
        %v1040 = vpop.f32.mrb[0].mxu0
        %v1041 = vadd.f32 0.0, %v1040
        %v1042 = vpop.f32.mrb[0].mxu0
        %1043 = vdwg.mxu0
        %v1044 = vlaneseq
        %v1045 = vshrl.u32 %v1044, 7
        %v1046 = vsub.s32 0, %v1045
        %v1047 = vrot.slane %v986, %v1046
        %v1048 = vadd.f32 %v832, %v1047
        %v1049 = vadd.f32 %v833, %v1047
        %v1050 = vadd.f32 %v1048, %v1038
        %v1051 = vadd.f32 %v1049, %v1041
        %v1052 = vadd.f32 %v838, %v986
        %v1053 = vpack.c.bf16 %v840, %v840
        %v1055 = vsel %vm941, %v1053, 0
        %1057 = vmatprep.subr.bf16.mxu0 0
        %1058 = vmatpush1.bf16.msra.mxu0 %v996
        %1059 = vmatprep.subr.bf16.mxu0 0
        %1060 = vmatpush1.bf16.msra.mxu0 %v997
        %1061 = vmatprep.subr.bf16.mxu0 0
        %1062 = vmatpush1.bf16.msra.mxu0 0
        %1063 = vmatprep.subr.bf16.mxu0 0
        %1064 = vmatpush1.bf16.msra.mxu0 0
        %1065 = vmatprep.subr.bf16.mxu0 0
        %1066 = vmatpush1.bf16.msra.mxu0 0
        %1067 = vmatprep.subr.bf16.mxu0 0
        %1068 = vmatpush1.bf16.msra.mxu0 0
        %1069 = vmatprep.subr.bf16.mxu0 0
        %1070 = vmatpush1.bf16.msra.mxu0 0
        %1071 = vmatprep.subr.bf16.mxu0 0
        %1072 = vmatpush1.bf16.msra.mxu0 0
        %1073 = vmatprep.subr.bf16.mxu0 0
        %1074 = vmatpush1.bf16.msra.mxu0 0
        %1075 = vmatprep.subr.bf16.mxu0 0
        %1076 = vmatpush1.bf16.msra.mxu0 0
        %1077 = vmatprep.subr.bf16.mxu0 0
        %1078 = vmatpush1.bf16.msra.mxu0 0
        %1079 = vmatprep.subr.bf16.mxu0 0
        %1080 = vmatpush1.bf16.msra.mxu0 0
        %1081 = vmatprep.subr.bf16.mxu0 0
        %1082 = vmatpush1.bf16.msra.mxu0 0
        %1083 = vmatprep.subr.bf16.mxu0 0
        %1084 = vmatpush1.bf16.msra.mxu0 0
        %1085 = vmatprep.subr.bf16.mxu0 0
        %1086 = vmatpush1.bf16.msra.mxu0 0
        %1087 = vmatprep.subr.bf16.mxu0 0
        %1088 = vmatpush1.bf16.msra.mxu0 0
        %1089 = vmatprep.mubr.bf16.mxu0 0
        %1090 = vmatmul.mubr.bf16.gmra.mrb[0].mxu0 %v1055
        %v1091 = vpop.f32.mrb[0].mxu0
        %v1092 = vadd.f32 0.0, %v1091
        %v1093 = vpop.f32.mrb[0].mxu0
        %v1094 = vpop.f32.mrb[0].mxu0
        %v1095 = vpop.f32.mrb[0].mxu0
        %1096 = vdwg.mxu0
        %v1097 = vadd.f32 %v1052, %v1092
        %v1098 = vadd.f32 %v839, %v986
        %v1099 = vpack.c.bf16 %v841, %v841
        %v1101 = vsel %vm941, %v1099, 0
        %1103 = vmatprep.subr.bf16.mxu0 0
        %1104 = vmatpush1.bf16.msra.mxu0 %v996
        %1105 = vmatprep.subr.bf16.mxu0 0
        %1106 = vmatpush1.bf16.msra.mxu0 %v997
        %1107 = vmatprep.subr.bf16.mxu0 0
        %1108 = vmatpush1.bf16.msra.mxu0 0
        %1109 = vmatprep.subr.bf16.mxu0 0
        %1110 = vmatpush1.bf16.msra.mxu0 0
        %1111 = vmatprep.subr.bf16.mxu0 0
        %1112 = vmatpush1.bf16.msra.mxu0 0
        %1113 = vmatprep.subr.bf16.mxu0 0
        %1114 = vmatpush1.bf16.msra.mxu0 0
        %1115 = vmatprep.subr.bf16.mxu0 0
        %1116 = vmatpush1.bf16.msra.mxu0 0
        %1117 = vmatprep.subr.bf16.mxu0 0
        %1118 = vmatpush1.bf16.msra.mxu0 0
        %1119 = vmatprep.subr.bf16.mxu0 0
        %1120 = vmatpush1.bf16.msra.mxu0 0
        %1121 = vmatprep.subr.bf16.mxu0 0
        %1122 = vmatpush1.bf16.msra.mxu0 0
        %1123 = vmatprep.subr.bf16.mxu0 0
        %1124 = vmatpush1.bf16.msra.mxu0 0
        %1125 = vmatprep.subr.bf16.mxu0 0
        %1126 = vmatpush1.bf16.msra.mxu0 0
        %1127 = vmatprep.subr.bf16.mxu0 0
        %1128 = vmatpush1.bf16.msra.mxu0 0
        %1129 = vmatprep.subr.bf16.mxu0 0
        %1130 = vmatpush1.bf16.msra.mxu0 0
        %1131 = vmatprep.subr.bf16.mxu0 0
        %1132 = vmatpush1.bf16.msra.mxu0 0
        %1133 = vmatprep.subr.bf16.mxu0 0
        %1134 = vmatpush1.bf16.msra.mxu0 0
        %1135 = vmatprep.mubr.bf16.mxu0 0
        %1136 = vmatmul.mubr.bf16.gmra.mrb[0].mxu0 %v1101
        %v1137 = vpop.f32.mrb[0].mxu0
        %v1138 = vadd.f32 0.0, %v1137
        %v1139 = vpop.f32.mrb[0].mxu0
        %v1140 = vpop.f32.mrb[0].mxu0
        %v1141 = vpop.f32.mrb[0].mxu0
        %1142 = vdwg.mxu0
        %v1143 = vadd.f32 %v1098, %v1138
        %p1144 = scmp.gt.s32.totalorder %s49, 0
        %s1145 = scalar_select %p1144, 1, 0
        %s1146 = scvt.s32.f32 %s1145
        %v1147 = vstv %s1146
        %v1148 = vmul.f32 %v1097, %v1147
        %p1149 = scmp.lt.s32.totalorder %s49, 0
        %s1150 = scalar_select %p1149, 1, 0
        %s1151 = scvt.s32.f32 %s1150
        %v1152 = vstv %s1151
        %v1153 = vmul.f32 %v1143, %v1152
        %v1154 = vlaneseq
        %v1155 = vshrl.u32 %v1154, 7
        %v1156 = vadd.s32 %v1155, 8
        %vm1157 = vcmp.eq.s32.totalorder %v1155, 0
        %vm1158 = vcmp.eq.s32.totalorder %v1156, 0
        %v1159 = vrot.slane %v1050, 7
        %v1160 = vrot.slane %v1051, 7
        %vm1161 = vcmp.lt.s32.totalorder %v1155, 1
        %v1162 = vsel %vm1161, %v1159, %v1160
        %v1163 = vsel %vm1161, %v1160, %v1159
        %v1165 = vlaneseq
        %v1166 = vshrl.u32 %v1165, 7
        %v1167 = vsub.s32 0, %v1166
        %v1168 = vrot.slane %v1148, %v1167
        %v1170 = vsel %vm1157, %v1168, %v1163
        %v1171 = vsel %vm1158, %v1168, %v1162
        %vm1172 = vcmp.eq.s32.totalorder %v1155, 15
        %vm1173 = vcmp.eq.s32.totalorder %v1156, 15
        %v1174 = vrot.slane %v1050, 1
        %v1175 = vrot.slane %v1051, 1
        %vm1176 = vcmp.lt.s32.totalorder %v1155, 7
        %v1177 = vsel %vm1176, %v1174, %v1175
        %v1178 = vsel %vm1176, %v1175, %v1174
        %v1180 = vlaneseq
        %v1181 = vshrl.u32 %v1180, 7
        %v1182 = vsub.s32 0, %v1181
        %v1183 = vrot.slane %v1153, %v1182
        %v1185 = vsel %vm1172, %v1183, %v1177
        %v1186 = vsel %vm1173, %v1183, %v1178
        %v1187 = vpack.c.bf16 %v1171, %v1170
        %v1188 = vld [vmem:[#allocation16] sm:$0xf]
        %v1189 = vld [vmem:[#allocation16 + $0x4] sm:$0xf]
        %v1190 = vld [vmem:[#allocation16 + $0x8] sm:$0xf]
        %v1191 = vld [vmem:[#allocation16 + $0xc] sm:$0xf]
        %v1192 = vld [vmem:[#allocation16 + $0x10] sm:$0xf]
        %v1193 = vld [vmem:[#allocation16 + $0x14] sm:$0xf]
        %v1194 = vld [vmem:[#allocation16 + $0x18] sm:$0xf]
        %v1195 = vld [vmem:[#allocation16 + $0x1c] sm:$0xf]
        %v1196 = vpack.c.bf16 %v1051, %v1050
        %s1197 = scalar_lea.vmem [#allocation16], 32
        %v1198 = vld [vmem:[%s1197] sm:$0xf]
        %v1199 = vld [vmem:[%s1197 + $0x4] sm:$0xf]
        %v1200 = vld [vmem:[%s1197 + $0x8] sm:$0xf]
        %v1201 = vld [vmem:[%s1197 + $0xc] sm:$0xf]
        %v1202 = vld [vmem:[%s1197 + $0x10] sm:$0xf]
        %v1203 = vld [vmem:[%s1197 + $0x14] sm:$0xf]
        %v1204 = vld [vmem:[%s1197 + $0x18] sm:$0xf]
        %v1205 = vld [vmem:[%s1197 + $0x1c] sm:$0xf]
        %v1214 = vunpack.c.l.b16 %v1198
        %v1215 = vunpack.c.l.b16 %v1199
        %v1216 = vunpack.c.l.b16 %v1200
        %v1217 = vunpack.c.l.b16 %v1201
        %v1218 = vunpack.c.l.b16 %v1202
        %v1219 = vunpack.c.l.b16 %v1203
        %v1220 = vunpack.c.l.b16 %v1204
        %v1221 = vunpack.c.l.b16 %v1205
        %v1222 = vpack.c.b16 %v1215, %v1214
        %v1223 = vpack.c.b16 %v1217, %v1216
        %v1224 = vpack.c.b16 %v1219, %v1218
        %v1225 = vpack.c.b16 %v1221, %v1220
        %v1231 = vsel %vm880, %v1196, 0
        %1233 = vmatprep.subr.bf16.mxu0 0
        %1234 = vmatpush1.bf16.msra.mxu0 %v1222
        %1235 = vmatprep.subr.bf16.mxu0 0
        %1236 = vmatpush1.bf16.msra.mxu0 %v1223
        %1237 = vmatprep.subr.bf16.mxu0 0
        %1238 = vmatpush1.bf16.msra.mxu0 %v1224
        %1239 = vmatprep.subr.bf16.mxu0 0
        %1240 = vmatpush1.bf16.msra.mxu0 %v1225
        %1241 = vmatprep.subr.bf16.mxu0 0
        %1242 = vmatpush1.bf16.msra.mxu0 0
        %1243 = vmatprep.subr.bf16.mxu0 0
        %1244 = vmatpush1.bf16.msra.mxu0 0
        %1245 = vmatprep.subr.bf16.mxu0 0
        %1246 = vmatpush1.bf16.msra.mxu0 0
        %1247 = vmatprep.subr.bf16.mxu0 0
        %1248 = vmatpush1.bf16.msra.mxu0 0
        %1249 = vmatprep.subr.bf16.mxu0 0
        %1250 = vmatpush1.bf16.msra.mxu0 0
        %1251 = vmatprep.subr.bf16.mxu0 0
        %1252 = vmatpush1.bf16.msra.mxu0 0
        %1253 = vmatprep.subr.bf16.mxu0 0
        %1254 = vmatpush1.bf16.msra.mxu0 0
        %1255 = vmatprep.subr.bf16.mxu0 0
        %1256 = vmatpush1.bf16.msra.mxu0 0
        %1257 = vmatprep.subr.bf16.mxu0 0
        %1258 = vmatpush1.bf16.msra.mxu0 0
        %1259 = vmatprep.subr.bf16.mxu0 0
        %1260 = vmatpush1.bf16.msra.mxu0 0
        %1261 = vmatprep.subr.bf16.mxu0 0
        %1262 = vmatpush1.bf16.msra.mxu0 0
        %1263 = vmatprep.subr.bf16.mxu0 0
        %1264 = vmatpush1.bf16.msra.mxu0 0
        %1265 = vmatprep.mubr.bf16.mxu0 0
        %1266 = vmatmul.mubr.bf16.gmra.mrb[0].mxu0 %v1231
        %v1267 = vpop.f32.mrb[0].mxu0
        %v1268 = vadd.f32 0.0, %v1267
        %v1269 = vpop.f32.mrb[0].mxu0
        %v1270 = vpop.f32.mrb[0].mxu0
        %v1271 = vadd.f32 0.0, %v1270
        %v1272 = vpop.f32.mrb[0].mxu0
        %1273 = vdwg.mxu0
        %v1282 = vunpack.c.l.b16 %v1188
        %v1283 = vunpack.c.l.b16 %v1189
        %v1284 = vunpack.c.l.b16 %v1190
        %v1285 = vunpack.c.l.b16 %v1191
        %v1286 = vunpack.c.l.b16 %v1192
        %v1287 = vunpack.c.l.b16 %v1193
        %v1288 = vunpack.c.l.b16 %v1194
        %v1289 = vunpack.c.l.b16 %v1195
        %v1290 = vpack.c.b16 %v1283, %v1282
        %v1291 = vpack.c.b16 %v1285, %v1284
        %v1292 = vpack.c.b16 %v1287, %v1286
        %v1293 = vpack.c.b16 %v1289, %v1288
        %v1299 = vsel %vm880, %v1187, 0
        %1301 = vmatprep.subr.bf16.mxu0 0
        %1302 = vmatpush1.bf16.msra.mxu0 %v1290
        %1303 = vmatprep.subr.bf16.mxu0 0
        %1304 = vmatpush1.bf16.msra.mxu0 %v1291
        %1305 = vmatprep.subr.bf16.mxu0 0
        %1306 = vmatpush1.bf16.msra.mxu0 %v1292
        %1307 = vmatprep.subr.bf16.mxu0 0
        %1308 = vmatpush1.bf16.msra.mxu0 %v1293
        %1309 = vmatprep.subr.bf16.mxu0 0
        %1310 = vmatpush1.bf16.msra.mxu0 0
        %1311 = vmatprep.subr.bf16.mxu0 0
        %1312 = vmatpush1.bf16.msra.mxu0 0
        %1313 = vmatprep.subr.bf16.mxu0 0
        %1314 = vmatpush1.bf16.msra.mxu0 0
        %1315 = vmatprep.subr.bf16.mxu0 0
        %1316 = vmatpush1.bf16.msra.mxu0 0
        %1317 = vmatprep.subr.bf16.mxu0 0
        %1318 = vmatpush1.bf16.msra.mxu0 0
        %1319 = vmatprep.subr.bf16.mxu0 0
        %1320 = vmatpush1.bf16.msra.mxu0 0
        %1321 = vmatprep.subr.bf16.mxu0 0
        %1322 = vmatpush1.bf16.msra.mxu0 0
        %1323 = vmatprep.subr.bf16.mxu0 0
        %1324 = vmatpush1.bf16.msra.mxu0 0
        %1325 = vmatprep.subr.bf16.mxu0 0
        %1326 = vmatpush1.bf16.msra.mxu0 0
        %1327 = vmatprep.subr.bf16.mxu0 0
        %1328 = vmatpush1.bf16.msra.mxu0 0
        %1329 = vmatprep.subr.bf16.mxu0 0
        %1330 = vmatpush1.bf16.msra.mxu0 0
        %1331 = vmatprep.subr.bf16.mxu0 0
        %1332 = vmatpush1.bf16.msra.mxu0 0
        %1333 = vmatprep.mubr.bf16.mxu0 0
        %1334 = vmatmul.mubr.bf16.gmra.mrb[0].mxu0 %v1299
        %v1335 = vpop.f32.mrb[0].mxu0
        %v1336 = vadd.f32 %v1268, %v1335
        %v1337 = vpop.f32.mrb[0].mxu0
        %v1338 = vpop.f32.mrb[0].mxu0
        %v1339 = vadd.f32 %v1271, %v1338
        %v1340 = vpop.f32.mrb[0].mxu0
        %1341 = vdwg.mxu0
        %v1342 = vpack.c.bf16 %v1186, %v1185
        %s1343 = scalar_lea.vmem [#allocation16], 64
        %v1344 = vld [vmem:[%s1343] sm:$0xf]
        %v1345 = vld [vmem:[%s1343 + $0x4] sm:$0xf]
        %v1346 = vld [vmem:[%s1343 + $0x8] sm:$0xf]
        %v1347 = vld [vmem:[%s1343 + $0xc] sm:$0xf]
        %v1348 = vld [vmem:[%s1343 + $0x10] sm:$0xf]
        %v1349 = vld [vmem:[%s1343 + $0x14] sm:$0xf]
        %v1350 = vld [vmem:[%s1343 + $0x18] sm:$0xf]
        %v1351 = vld [vmem:[%s1343 + $0x1c] sm:$0xf]
        %v1360 = vunpack.c.l.b16 %v1344
        %v1361 = vunpack.c.l.b16 %v1345
        %v1362 = vunpack.c.l.b16 %v1346
        %v1363 = vunpack.c.l.b16 %v1347
        %v1364 = vunpack.c.l.b16 %v1348
        %v1365 = vunpack.c.l.b16 %v1349
        %v1366 = vunpack.c.l.b16 %v1350
        %v1367 = vunpack.c.l.b16 %v1351
        %v1368 = vpack.c.b16 %v1361, %v1360
        %v1369 = vpack.c.b16 %v1363, %v1362
        %v1370 = vpack.c.b16 %v1365, %v1364
        %v1371 = vpack.c.b16 %v1367, %v1366
        %v1377 = vsel %vm880, %v1342, 0
        %1379 = vmatprep.subr.bf16.mxu0 0
        %1380 = vmatpush1.bf16.msra.mxu0 %v1368
        %1381 = vmatprep.subr.bf16.mxu0 0
        %1382 = vmatpush1.bf16.msra.mxu0 %v1369
        %1383 = vmatprep.subr.bf16.mxu0 0
        %1384 = vmatpush1.bf16.msra.mxu0 %v1370
        %1385 = vmatprep.subr.bf16.mxu0 0
        %1386 = vmatpush1.bf16.msra.mxu0 %v1371
        %1387 = vmatprep.subr.bf16.mxu0 0
        %1388 = vmatpush1.bf16.msra.mxu0 0
        %1389 = vmatprep.subr.bf16.mxu0 0
        %1390 = vmatpush1.bf16.msra.mxu0 0
        %1391 = vmatprep.subr.bf16.mxu0 0
        %1392 = vmatpush1.bf16.msra.mxu0 0
        %1393 = vmatprep.subr.bf16.mxu0 0
        %1394 = vmatpush1.bf16.msra.mxu0 0
        %1395 = vmatprep.subr.bf16.mxu0 0
        %1396 = vmatpush1.bf16.msra.mxu0 0
        %1397 = vmatprep.subr.bf16.mxu0 0
        %1398 = vmatpush1.bf16.msra.mxu0 0
        %1399 = vmatprep.subr.bf16.mxu0 0
        %1400 = vmatpush1.bf16.msra.mxu0 0
        %1401 = vmatprep.subr.bf16.mxu0 0
        %1402 = vmatpush1.bf16.msra.mxu0 0
        %1403 = vmatprep.subr.bf16.mxu0 0
        %1404 = vmatpush1.bf16.msra.mxu0 0
        %1405 = vmatprep.subr.bf16.mxu0 0
        %1406 = vmatpush1.bf16.msra.mxu0 0
        %1407 = vmatprep.subr.bf16.mxu0 0
        %1408 = vmatpush1.bf16.msra.mxu0 0
        %1409 = vmatprep.subr.bf16.mxu0 0
        %1410 = vmatpush1.bf16.msra.mxu0 0
        %1411 = vmatprep.mubr.bf16.mxu0 0
        %1412 = vmatmul.mubr.bf16.gmra.mrb[0].mxu0 %v1377
        %v1413 = vpop.f32.mrb[0].mxu0
        %v1414 = vadd.f32 0.0, %v1413
        %v1415 = vpop.f32.mrb[0].mxu0
        %v1416 = vpop.f32.mrb[0].mxu0
        %v1417 = vadd.f32 0.0, %v1416
        %v1418 = vpop.f32.mrb[0].mxu0
        %1419 = vdwg.mxu0
        %v1420 = vadd.f32 %v1336, %v1414
        %v1421 = vadd.f32 %v1339, %v1417
        %v1422 = vld [vmem:[#allocation17] sm:$0x1]
        %v1424 = vlaneseq
        %v1425 = vshrl.u32 %v1424, 7
        %v1426 = vsub.s32 0, %v1425
        %v1427 = vrot.slane %v1422, %v1426
        %v1429 = vadd.f32 %v1420, %v1427
        %v1430 = vadd.f32 %v1421, %v1427
        %v1431 = vxor.u32 %v1429, 2147483648
        %v1432 = vxor.u32 %v1430, 2147483648
        %v1433 = vmul.f32 %v1431, 1.442695
        %v1434 = vpow.pop %v1433
        %v1435 = vmul.f32 %v1432, 1.442695
        %v1436 = vpow.pop %v1435
        %v1437 = vadd.f32 %v1434, 1.0
        %v1438 = vadd.f32 %v1436, 1.0
        %v1439 = vrcp.pop %v1437
        %v1440 = vmul.f32 1.0, %v1439
        %v1441 = vrcp.pop %v1438
        %v1442 = vmul.f32 1.0, %v1441
        %v1443 = vtanh.pop %v1429
        %v1444 = vtanh.pop %v1430
        %1447 = vrot.lane.b32.xlu0 %v1443, 64
        %v1448 = vpop.permute.xlu0 %1447
        %1449 = vrot.lane.b32.xlu0 %v1444, 64
        %v1450 = vpop.permute.xlu0 %1449
        %v1453 = vmul.f32 %v1440, %v1448
        %v1454 = vmul.f32 %v1442, %v1450
        %v1455 = vpack.c.bf16 %v1454, %v1453
        %v1456 = vld [vmem:[%s14] sm:$0xf]
        %v1457 = vld [vmem:[%s14 + $0x4] sm:$0xf]
        %v1458 = vld [vmem:[%s14 + $0x8] sm:$0xf]
        %v1459 = vld [vmem:[%s14 + $0xc] sm:$0xf]
        %v1460 = vld [vmem:[%s14 + $0x10] sm:$0xf]
        %v1461 = vld [vmem:[%s14 + $0x14] sm:$0xf]
        %v1462 = vld [vmem:[%s14 + $0x18] sm:$0xf]
        %v1463 = vld [vmem:[%s14 + $0x1c] sm:$0xf]
        %v1464 = vld [vmem:[%s15] sm:$0x1]
        %v1466 = vlaneseq
        %v1467 = vshrl.u32 %v1466, 7
        %v1468 = vsub.s32 0, %v1467
        %v1469 = vrot.slane %v1464, %v1468
        %v1479 = vunpack.c.l.b16 %v1456
        %v1480 = vunpack.c.l.b16 %v1457
        %v1481 = vunpack.c.l.b16 %v1458
        %v1482 = vunpack.c.l.b16 %v1459
        %v1483 = vunpack.c.l.b16 %v1460
        %v1484 = vunpack.c.l.b16 %v1461
        %v1485 = vunpack.c.l.b16 %v1462
        %v1486 = vunpack.c.l.b16 %v1463
        %v1487 = vpack.c.b16 %v1480, %v1479
        %v1488 = vpack.c.b16 %v1482, %v1481
        %v1489 = vpack.c.b16 %v1484, %v1483
        %v1490 = vpack.c.b16 %v1486, %v1485
        %v1496 = vsel %vm880, %v1455, 0
        %1498 = vmatprep.subr.bf16.mxu0 0
        %1499 = vmatpush1.bf16.msra.mxu0 %v1487
        %1500 = vmatprep.subr.bf16.mxu0 0
        %1501 = vmatpush1.bf16.msra.mxu0 %v1488
        %1502 = vmatprep.subr.bf16.mxu0 0
        %1503 = vmatpush1.bf16.msra.mxu0 %v1489
        %1504 = vmatprep.subr.bf16.mxu0 0
        %1505 = vmatpush1.bf16.msra.mxu0 %v1490
        %1506 = vmatprep.subr.bf16.mxu0 0
        %1507 = vmatpush1.bf16.msra.mxu0 0
        %1508 = vmatprep.subr.bf16.mxu0 0
        %1509 = vmatpush1.bf16.msra.mxu0 0
        %1510 = vmatprep.subr.bf16.mxu0 0
        %1511 = vmatpush1.bf16.msra.mxu0 0
        %1512 = vmatprep.subr.bf16.mxu0 0
        %1513 = vmatpush1.bf16.msra.mxu0 0
        %1514 = vmatprep.subr.bf16.mxu0 0
        %1515 = vmatpush1.bf16.msra.mxu0 0
        %1516 = vmatprep.subr.bf16.mxu0 0
        %1517 = vmatpush1.bf16.msra.mxu0 0
        %1518 = vmatprep.subr.bf16.mxu0 0
        %1519 = vmatpush1.bf16.msra.mxu0 0
        %1520 = vmatprep.subr.bf16.mxu0 0
        %1521 = vmatpush1.bf16.msra.mxu0 0
        %1522 = vmatprep.subr.bf16.mxu0 0
        %1523 = vmatpush1.bf16.msra.mxu0 0
        %1524 = vmatprep.subr.bf16.mxu0 0
        %1525 = vmatpush1.bf16.msra.mxu0 0
        %1526 = vmatprep.subr.bf16.mxu0 0
        %1527 = vmatpush1.bf16.msra.mxu0 0
        %1528 = vmatprep.subr.bf16.mxu0 0
        %1529 = vmatpush1.bf16.msra.mxu0 0
        %1530 = vmatprep.mubr.bf16.mxu0 0
        %1531 = vmatmul.mubr.bf16.gmra.mrb[0].mxu0 %v1496
        %v1532 = vpop.f32.mrb[0].mxu0
        %v1533 = vadd.f32 %v1469, %v1532
        %v1534 = vpop.f32.mrb[0].mxu0
        %v1535 = vpop.f32.mrb[0].mxu0
        %v1536 = vadd.f32 %v1469, %v1535
        %v1537 = vpop.f32.mrb[0].mxu0
        %1538 = vdwg.mxu0
        %v1539 = vlaneseq
        %v1540 = vshrl.u32 %v1539, 7
        %v1541 = vsub.s32 0, %v1540
        %v1542 = vrot.slane %v919, %v1541
        %v1543 = vadd.f32 %v832, %v1542
        %v1544 = vadd.f32 %v833, %v1542
        %v1545 = vadd.f32 %v1533, %v1543
        %v1546 = vadd.f32 %v1536, %v1544
        %v1547 = vmul.f32 %v1545, 0.70710677
        %v1548 = vmul.f32 %v1546, 0.70710677
        %v1549 = vsel %vm880, %v1547, %v1533
        %v1550 = vsel %vm880, %v1548, %v1536
        %1551 = vst [vmem:[%s821] sm:$0xff] %v1549
        %1552 = vst [vmem:[%s821 + $0x8] sm:$0xff] %v1550
        %s1553 = sand.u32 %s454, 1
        %s1554 = scalar_lea.sflag [#allocation4], %s1553
        %s1555 = sand.u32 %s454, 1
        %s1556 = smul.addr %s1555, 16
        %s1557 = scalar_lea.vmem [#allocation19], %s1556
        // Predicated region
        $region125: #{tpu_custom_call.1} parent=83 // pred_check
          %p1558 = pneg %p464
        $region126: #{tpu_custom_call.1} parent=83 // pred_check_branch
          %1560 = sbr.rel (%p1558) target = $region128
        $region127: #{tpu_custom_call.1} parent=83 // pred_region
          %s1561 = smul.u32 2, %s49
          %s1563 = ssub.s32 256, 256
          %1564 = vsyncadd %s1554, %s1563
          %s1565 = smul.addr %s48, 2
          %s1566 = sadd.s32 %s1561, %s1565
          %s1567 = smul.addr %s1566, 128
          %s1568 = scalar_lea.hbm %s16, %s1567
          %s1569 = sshll.u32 %s1557, 4
          %s1570 = int_to_ptr.vmem [resolvable:$true] %s1569
          %1575 = dma.vmem_to_hbm [thread:$0]  %s1570, 256, %s1568, %s1554, 128, 128, 8
        $region128: #{tpu_custom_call.1} parent=83 // pred_fallthru
          _
      $region84: #{tpu_custom_call.1} parent=5 // pred_fallthru
        _
      %p1576 = scmp.le.s32.totalorder 2, %s39
      // Predicated region
      $region129: #{tpu_custom_call.1} parent=5 // pred_check
        %p1577 = pneg %p1576
      $region130: #{tpu_custom_call.1} parent=5 // pred_check_branch
        %1579 = sbr.rel (%p1577) target = $region132
      $region131: #{tpu_custom_call.1} parent=5 // pred_region
        %s1580 = ssub.s32 %s39, 2
        // Predicated region
        $region133: #{tpu_custom_call.1} parent=131 // pred_check
          %p1581 = pneg %p470
        $region134: #{tpu_custom_call.1} parent=131 // pred_check_branch
          %1583 = sbr.rel (%p1581) target = $region136
        $region135: #{tpu_custom_call.1} parent=131 // pred_region
          %s1584 = sand.u32 %s455, 1
          %s1585 = scalar_lea.sflag [#allocation4], %s1584
          %s1586 = sand.u32 %s455, 1
          %s1587 = smul.addr %s1586, 16
          %s1588 = scalar_lea.vmem [#allocation19], %s1587
          %1589 = dma.done %s1585, 256
        $region136: #{tpu_custom_call.1} parent=131 // pred_fallthru
          _
      $region132: #{tpu_custom_call.1} parent=5 // pred_fallthru
        _
    $region6: #{tpu_custom_call.1} parent=1 // loop_footer
      %s43 = sadd.s32 1, %s39
    $region7: #{tpu_custom_call.1} parent=1 // loop_footer_branch
      %38 = sbr.rel target = $region3
    $region8: #{tpu_custom_call.1} parent=1 // loop_exit
      _
    %1590 = vsyncpa [#allocation3], 1
    %s1591 = scalar_lea.sflag [#allocation3], 1
    %1592 = vsyncpa %s1591, 1
    %1593 = vsyncpa [#allocation6], 1
    %s1594 = scalar_lea.sflag [#allocation6], 1
    %1595 = vsyncpa %s1594, 1
    %1596 = vsyncpa [#allocation9], 1
    %s1597 = scalar_lea.sflag [#allocation9], 1
    %1598 = vsyncpa %s1597, 1
    %1599 = vsyncpa [#allocation12], 1
    %s1600 = scalar_lea.sflag [#allocation12], 1
    %1601 = vsyncpa %s1600, 1
    %1602 = vsyncpa [#allocation15], 1
    %1603 = vsyncpa [#allocation18], 1
    %1604 = vsyncpa [#allocation4], 1
    %s1605 = scalar_lea.sflag [#allocation4], 1
    %1606 = vsyncpa %s1605, 1

</llo_original>
